<compile_context>
chip_gen: v7x
topology: tpu7x:2x2x1
jax: 0.10.0
libtpu: 0.0.40
codegen_flags: <defaults>
</compile_context>

<pallas_src>
import functools
import math

import jax
import jax.numpy as jnp
from jax.experimental import pallas as pl
from jax.experimental.pallas import tpu as pltpu


def _encoder_kernel(src_ref, wqkv_ref, bqkv_ref, wo_ref, bo_ref,
                    g1_ref, beta1_ref, wff1_ref, bff1_ref,
                    wff2_ref, bff2_ref, g2_ref, beta2_ref,
                    out_ref, *, n_heads):
    B, L, D = src_ref.shape
    d_k = D // n_heads
    inv_sqrt2 = jnp.float32(1.0 / math.sqrt(2.0))
    eps = jnp.float32(1e-5)

    x3 = src_ref[...]                         # [B, L, D] f32
    x = x3.reshape(B * L, D)                  # leading-dim fold (free reshape)
    x_bf = x.astype(jnp.bfloat16)

    # --- fused QKV projection: one bf16 MXU pass (scale pre-folded into Q) --
    qkv = jnp.dot(x_bf, wqkv_ref[...], preferred_element_type=jnp.float32)
    qkv = qkv + bqkv_ref[...]                 # [B*L, 3*D] f32
    qkv3 = qkv.reshape(B, L, 3 * D)

    wo = wo_ref[...]                          # [D, D] bf16, loaded once

    # --- per-head attention, batched over B, W_O fused into the loop --------
    # Head outputs never touch VMEM: o_h @ W_O[h] is accumulated in registers.
    src2 = jnp.zeros((B * L, D), jnp.float32)
    for h in range(n_heads):                  # static unroll (small H)
        lo = h * d_k
        qh = qkv3[:, :, lo:lo + d_k].astype(jnp.bfloat16)            # [B,L,d_k]
        kh = qkv3[:, :, D + lo:D + lo + d_k].astype(jnp.bfloat16)
        vh = qkv3[:, :, 2 * D + lo:2 * D + lo + d_k].astype(jnp.bfloat16)
        s = jnp.einsum('bqd,bkd->bqk', qh, kh,
                       preferred_element_type=jnp.float32)            # scaled already
        m = jnp.max(s, axis=-1, keepdims=True)
        e = jnp.exp(s - m)
        denom = jnp.sum(e, axis=-1, keepdims=True)
        p = (e * pl.reciprocal(denom, approx=True)).astype(jnp.bfloat16)
        oh = jnp.einsum('bqk,bkd->bqd', p, vh,
                        preferred_element_type=jnp.float32)           # [B,L,d_k]
        oh2 = oh.reshape(B * L, d_k).astype(jnp.bfloat16)
        src2 = src2 + jnp.dot(oh2, wo[lo:lo + d_k, :],
                              preferred_element_type=jnp.float32)
    src2 = src2 + bo_ref[...]
    y = x + src2                              # residual in f32

    # --- BatchNorm1d(d_model), training-mode stats, centered two-pass -------
    def batchnorm(t, g_ref, b_ref):
        mean = jnp.mean(t, axis=0, keepdims=True)
        d = t - mean
        var = jnp.mean(d * d, axis=0, keepdims=True)
        return d * (g_ref[...] * jax.lax.rsqrt(var + eps)) + b_ref[...]

    y = batchnorm(y, g1_ref, beta1_ref)

    # --- position-wise feed-forward (exact erf GELU, matches nn.GELU) -------
    h1 = jnp.dot(y.astype(jnp.bfloat16), wff1_ref[...],
                 preferred_element_type=jnp.float32)
    h1 = h1 + bff1_ref[...]
    h1 = 0.5 * h1 * (1.0 + jax.lax.erf(h1 * inv_sqrt2))
    f = jnp.dot(h1.astype(jnp.bfloat16), wff2_ref[...],
                preferred_element_type=jnp.float32)
    f = f + bff2_ref[...]
    z = batchnorm(y + f, g2_ref, beta2_ref)

    out_ref[...] = z.reshape(B, L, D).astype(out_ref.dtype)


def prepare_kernel_params(p, n_heads):
    """One-time parameter transformation (done at load time, not per call):
    fuse wq|wk|wv, fold the attention scale into the Q columns + bias, and
    cast matmul weights to bf16 (biases/BN affine stay f32)."""
    D = p['wq'].shape[0]
    assert D % n_heads == 0, "n_heads must divide d_model"
    scale = p['scale'][0, 0]                  # d_k ** -0.5
    wqkv = jnp.concatenate([p['wq'] * scale, p['wk'], p['wv']], axis=1)
    bqkv = jnp.concatenate([p['bq'] * scale, p['bk'], p['bv']], axis=1)
    return {
        'wqkv': wqkv.astype(jnp.bfloat16),
        'bqkv': bqkv.astype(jnp.float32),
        'wo': p['wo'].astype(jnp.bfloat16), 'bo': p['bo'],
        'bn1_g': p['bn1_g'], 'bn1_b': p['bn1_b'],
        'wff1': p['wff1'].astype(jnp.bfloat16), 'bff1': p['bff1'],
        'wff2': p['wff2'].astype(jnp.bfloat16), 'bff2': p['bff2'],
        'bn2_g': p['bn2_g'], 'bn2_b': p['bn2_b'],
    }


def tst_encoder_layer(src, kp, n_heads):
    B, L, D = src.shape
    vmem = pl.BlockSpec(memory_space=pltpu.MemorySpace.VMEM)
    args = (
        src, kp['wqkv'], kp['bqkv'], kp['wo'], kp['bo'],
        kp['bn1_g'], kp['bn1_b'], kp['wff1'], kp['bff1'],
        kp['wff2'], kp['bff2'], kp['bn2_g'], kp['bn2_b'],
    )
    # Production-scale plan (deferred at this toy size): grid over B*L row
    # tiles, dimension_semantics=("parallel",...), two-pass accumulate/
    # finalize BatchNorm, constant index_maps on weights (VMEM-resident),
    # tiles re-derived against 64 MiB VMEM on v7x / raised scoped limit on v5e.
    return pl.pallas_call(
        functools.partial(_encoder_kernel, n_heads=n_heads),
        out_shape=jax.ShapeDtypeStruct((B, L, D), jnp.float32),
        in_specs=[vmem] * len(args),
        out_specs=vmem,
        compiler_params=pltpu.CompilerParams(vmem_limit_bytes=32 * 1024 * 1024),
    )(*args)


def _reference(src, p, n_heads):
    """Plain-JAX f32 reference mirroring the PyTorch module (training-mode BN)."""
    B, L, D = src.shape
    d_k = D // n_heads
    x = src.reshape(B * L, D)
    q = x @ p['wq'] + p['bq']
    k = x @ p['wk'] + p['bk']
    v = x @ p['wv'] + p['bv']
    q4 = q.reshape(B, L, n_heads, d_k).transpose(0, 2, 1, 3)
    k4 = k.reshape(B, L, n_heads, d_k).transpose(0, 2, 1, 3)
    v4 = v.reshape(B, L, n_heads, d_k).transpose(0, 2, 1, 3)
    scores = jnp.einsum('bhqd,bhkd->bhqk', q4, k4) * p['scale'][0, 0]
    w = jax.nn.softmax(scores, axis=-1)
    o = jnp.einsum('bhqk,bhkd->bhqd', w, v4)
    o = o.transpose(0, 2, 1, 3).reshape(B * L, n_heads * d_k)
    src2 = o @ p['wo'] + p['bo']
    y = x + src2
    m1 = y.mean(0, keepdims=True)
    v1 = ((y - m1) ** 2).mean(0, keepdims=True)
    y = (y - m1) / jnp.sqrt(v1 + 1e-5) * p['bn1_g'] + p['bn1_b']
    h = y @ p['wff1'] + p['bff1']
    h = jax.nn.gelu(h, approximate=False)
    f = h @ p['wff2'] + p['bff2']
    z = y + f
    m2 = z.mean(0, keepdims=True)
    v2 = ((z - m2) ** 2).mean(0, keepdims=True)
    z = (z - m2) / jnp.sqrt(v2 + 1e-5) * p['bn2_g'] + p['bn2_b']
    return z.reshape(B, L, D)


def make_params(key, d_model, n_heads, d_ff):
    d_k = d_model // n_heads
    ks = jax.random.split(key, 12)

    def w(k, shape, s=0.05):
        return (s * jax.random.normal(k, shape)).astype(jnp.float32)

    return {
        # Linear weights stored as [in, out] (PyTorch stores [out, in]).
        'wq': w(ks[0], (d_model, n_heads * d_k)),
        'bq': w(ks[1], (1, n_heads * d_k)),
        'wk': w(ks[2], (d_model, n_heads * d_k)),
        'bk': w(ks[3], (1, n_heads * d_k)),
        'wv': w(ks[4], (d_model, n_heads * d_k)),
        'bv': w(ks[5], (1, n_heads * d_k)),
        'wo': w(ks[6], (n_heads * d_k, d_model)),
        'bo': w(ks[7], (1, d_model)),
        'scale': jnp.full((1, 1), d_k ** (-0.5), dtype=jnp.float32),
        'bn1_g': jnp.ones((1, d_model), jnp.float32),
        'bn1_b': jnp.zeros((1, d_model), jnp.float32),
        'wff1': w(ks[8], (d_model, d_ff)),
        'bff1': w(ks[9], (1, d_ff)),
        'wff2': w(ks[10], (d_ff, d_model)),
        'bff2': w(ks[11], (1, d_model)),
        'bn2_g': jnp.ones((1, d_model), jnp.float32),
        'bn2_b': jnp.zeros((1, d_model), jnp.float32),
    }


if __name__ == "__main__":
    B, L, D, H, D_FF = 2, 16, 32, 4, 64   # bs, q_len, d_model, n_heads, d_ff
    key = jax.random.PRNGKey(0)
    k_src, k_par = jax.random.split(key)
    src = jax.random.normal(k_src, (B, L, D), dtype=jnp.float32)
    params = make_params(k_par, D, H, D_FF)
    kparams = prepare_kernel_params(params, H)   # one-time fusion/cast

    out = tst_encoder_layer(src, kparams, H)
    out = jax.block_until_ready(out)

    ref = _reference(src, params, H)
    assert out.shape == (B, L, D)
    # Tolerance budget: bf16 matmul operands (~2^-9 relative per operand) over
    # five linears + the EUP approx reciprocal in softmax; expected max error
    # ~5e-3 on unit-variance post-BN outputs, so 2e-2 is a comfortable bound
    # while still catching any real semantic bug (which would be O(0.1-1)).
    assert jnp.max(jnp.abs(out - ref)) < 2e-2, "mismatch vs JAX reference"

    print("KERNEL_OK")
</pallas_src>

<mosaic_0001>
module attributes {stable_mosaic.version = 11 : i64} {
  func.func @_encoder_kernel(%arg0: memref<2x16x32xf32, #tpu.memory_space<vmem>>, %arg1: memref<32x96xbf16, #tpu.memory_space<vmem>>, %arg2: memref<1x96xf32, #tpu.memory_space<vmem>>, %arg3: memref<32x32xbf16, #tpu.memory_space<vmem>>, %arg4: memref<1x32xf32, #tpu.memory_space<vmem>>, %arg5: memref<1x32xf32, #tpu.memory_space<vmem>>, %arg6: memref<1x32xf32, #tpu.memory_space<vmem>>, %arg7: memref<32x64xbf16, #tpu.memory_space<vmem>>, %arg8: memref<1x64xf32, #tpu.memory_space<vmem>>, %arg9: memref<64x32xbf16, #tpu.memory_space<vmem>>, %arg10: memref<1x32xf32, #tpu.memory_space<vmem>>, %arg11: memref<1x32xf32, #tpu.memory_space<vmem>>, %arg12: memref<1x32xf32, #tpu.memory_space<vmem>>, %arg13: memref<2x16x32xf32, #tpu.memory_space<vmem>>) attributes {dimension_semantics = [], scalar_prefetch = 0 : i64, scratch_operands = 0 : i64, tpu.core_type = #tpu.core_type<tc>} {
    %c0 = arith.constant 0 : index
    %c0_0 = arith.constant 0 : index
    %c0_1 = arith.constant 0 : index
    %0 = vector.load %arg0[%c0, %c0_0, %c0_1] : memref<2x16x32xf32, #tpu.memory_space<vmem>>, vector<2x16x32xf32>
    %1 = vector.shape_cast %0 : vector<2x16x32xf32> to vector<32x32xf32>
    %2 = arith.truncf %1 : vector<32x32xf32> to vector<32x32xbf16>
    %c0_2 = arith.constant 0 : index
    %c0_3 = arith.constant 0 : index
    %3 = vector.load %arg1[%c0_2, %c0_3] : memref<32x96xbf16, #tpu.memory_space<vmem>>, vector<32x96xbf16>
    %cst = arith.constant dense<0.000000e+00> : vector<32x96xf32>
    %4 = tpu.matmul %2, %3, %cst {dimension_numbers = #tpu.dot_dimension_numbers<[1], [0], [0], [1], [0, 0, 1, 1], [], []>} : vector<32x32xbf16>, vector<32x96xbf16>, vector<32x96xf32> -> vector<32x96xf32>
    %c0_4 = arith.constant 0 : index
    %c0_5 = arith.constant 0 : index
    %5 = vector.load %arg2[%c0_4, %c0_5] : memref<1x96xf32, #tpu.memory_space<vmem>>, vector<1x96xf32>
    %6 = vector.broadcast %5 : vector<1x96xf32> to vector<32x96xf32>
    %7 = arith.addf %4, %6 : vector<32x96xf32>
    %8 = vector.shape_cast %7 : vector<32x96xf32> to vector<2x16x96xf32>
    %c0_6 = arith.constant 0 : index
    %c0_7 = arith.constant 0 : index
    %9 = vector.load %arg3[%c0_6, %c0_7] : memref<32x32xbf16, #tpu.memory_space<vmem>>, vector<32x32xbf16>
    %cst_8 = arith.constant 0.000000e+00 : f32
    %10 = vector.broadcast %cst_8 : f32 to vector<32x32xf32>
    %11 = vector.extract_strided_slice %8 {offsets = [0, 0, 0], sizes = [2, 16, 8], strides = [1, 1, 1]} : vector<2x16x96xf32> to vector<2x16x8xf32>
    %12 = arith.truncf %11 : vector<2x16x8xf32> to vector<2x16x8xbf16>
    %13 = vector.extract_strided_slice %8 {offsets = [0, 0, 32], sizes = [2, 16, 8], strides = [1, 1, 1]} : vector<2x16x96xf32> to vector<2x16x8xf32>
    %14 = arith.truncf %13 : vector<2x16x8xf32> to vector<2x16x8xbf16>
    %15 = vector.extract_strided_slice %8 {offsets = [0, 0, 64], sizes = [2, 16, 8], strides = [1, 1, 1]} : vector<2x16x96xf32> to vector<2x16x8xf32>
    %16 = arith.truncf %15 : vector<2x16x8xf32> to vector<2x16x8xbf16>
    "tpu.trace_start"() <{level = 10 : i32, message = "bqd,bkd->bqk"}> : () -> ()
    %cst_9 = arith.constant dense<0.000000e+00> : vector<2x16x16xf32>
    %17 = tpu.matmul %12, %14, %cst_9 {dimension_numbers = #tpu.dot_dimension_numbers<[2], [2], [1], [1], [0, 0, 0, 1, 1, 1], [0], [0]>} : vector<2x16x8xbf16>, vector<2x16x8xbf16>, vector<2x16x16xf32> -> vector<2x16x16xf32>
    "tpu.trace_stop"() : () -> ()
    %cst_10 = arith.constant dense<0xFF800000> : vector<2x16xf32>
    %18 = vector.multi_reduction <maximumf>, %17, %cst_10 [2] : vector<2x16x16xf32> to vector<2x16xf32>
    %19 = vector.shape_cast %18 : vector<2x16xf32> to vector<2x16x1xf32>
    %20 = vector.broadcast %19 : vector<2x16x1xf32> to vector<2x16x16xf32>
    %21 = arith.subf %17, %20 : vector<2x16x16xf32>
    %22 = math.exp %21 : vector<2x16x16xf32>
    %cst_11 = arith.constant dense<0.000000e+00> : vector<2x16xf32>
    %23 = vector.multi_reduction <add>, %22, %cst_11 [2] : vector<2x16x16xf32> to vector<2x16xf32>
    %24 = vector.shape_cast %23 : vector<2x16xf32> to vector<2x16x1xf32>
    %25 = tpu.reciprocal %24 {approx = true} : vector<2x16x1xf32> -> vector<2x16x1xf32>
    %26 = vector.broadcast %25 : vector<2x16x1xf32> to vector<2x16x16xf32>
    %27 = arith.mulf %22, %26 : vector<2x16x16xf32>
    %28 = arith.truncf %27 : vector<2x16x16xf32> to vector<2x16x16xbf16>
    "tpu.trace_start"() <{level = 10 : i32, message = "bqk,bkd->bqd"}> : () -> ()
    %cst_12 = arith.constant dense<0.000000e+00> : vector<2x16x8xf32>
    %29 = tpu.matmul %28, %16, %cst_12 {dimension_numbers = #tpu.dot_dimension_numbers<[2], [1], [1], [2], [0, 0, 0, 1, 1, 2], [0], [0]>} : vector<2x16x16xbf16>, vector<2x16x8xbf16>, vector<2x16x8xf32> -> vector<2x16x8xf32>
    "tpu.trace_stop"() : () -> ()
    %30 = vector.shape_cast %29 : vector<2x16x8xf32> to vector<32x8xf32>
    %31 = arith.truncf %30 : vector<32x8xf32> to vector<32x8xbf16>
    %32 = vector.extract_strided_slice %9 {offsets = [0, 0], sizes = [8, 32], strides = [1, 1]} : vector<32x32xbf16> to vector<8x32xbf16>
    %cst_13 = arith.constant dense<0.000000e+00> : vector<32x32xf32>
    %33 = tpu.matmul %31, %32, %cst_13 {dimension_numbers = #tpu.dot_dimension_numbers<[1], [0], [0], [1], [0, 0, 1, 1], [], []>} : vector<32x8xbf16>, vector<8x32xbf16>, vector<32x32xf32> -> vector<32x32xf32>
    %34 = arith.addf %10, %33 : vector<32x32xf32>
    %35 = vector.extract_strided_slice %8 {offsets = [0, 0, 8], sizes = [2, 16, 8], strides = [1, 1, 1]} : vector<2x16x96xf32> to vector<2x16x8xf32>
    %36 = arith.truncf %35 : vector<2x16x8xf32> to vector<2x16x8xbf16>
    %37 = vector.extract_strided_slice %8 {offsets = [0, 0, 40], sizes = [2, 16, 8], strides = [1, 1, 1]} : vector<2x16x96xf32> to vector<2x16x8xf32>
    %38 = arith.truncf %37 : vector<2x16x8xf32> to vector<2x16x8xbf16>
    %39 = vector.extract_strided_slice %8 {offsets = [0, 0, 72], sizes = [2, 16, 8], strides = [1, 1, 1]} : vector<2x16x96xf32> to vector<2x16x8xf32>
    %40 = arith.truncf %39 : vector<2x16x8xf32> to vector<2x16x8xbf16>
    "tpu.trace_start"() <{level = 10 : i32, message = "bqd,bkd->bqk"}> : () -> ()
    %cst_14 = arith.constant dense<0.000000e+00> : vector<2x16x16xf32>
    %41 = tpu.matmul %36, %38, %cst_14 {dimension_numbers = #tpu.dot_dimension_numbers<[2], [2], [1], [1], [0, 0, 0, 1, 1, 1], [0], [0]>} : vector<2x16x8xbf16>, vector<2x16x8xbf16>, vector<2x16x16xf32> -> vector<2x16x16xf32>
    "tpu.trace_stop"() : () -> ()
    %cst_15 = arith.constant dense<0xFF800000> : vector<2x16xf32>
    %42 = vector.multi_reduction <maximumf>, %41, %cst_15 [2] : vector<2x16x16xf32> to vector<2x16xf32>
    %43 = vector.shape_cast %42 : vector<2x16xf32> to vector<2x16x1xf32>
    %44 = vector.broadcast %43 : vector<2x16x1xf32> to vector<2x16x16xf32>
    %45 = arith.subf %41, %44 : vector<2x16x16xf32>
    %46 = math.exp %45 : vector<2x16x16xf32>
    %cst_16 = arith.constant dense<0.000000e+00> : vector<2x16xf32>
    %47 = vector.multi_reduction <add>, %46, %cst_16 [2] : vector<2x16x16xf32> to vector<2x16xf32>
    %48 = vector.shape_cast %47 : vector<2x16xf32> to vector<2x16x1xf32>
    %49 = tpu.reciprocal %48 {approx = true} : vector<2x16x1xf32> -> vector<2x16x1xf32>
    %50 = vector.broadcast %49 : vector<2x16x1xf32> to vector<2x16x16xf32>
    %51 = arith.mulf %46, %50 : vector<2x16x16xf32>
    %52 = arith.truncf %51 : vector<2x16x16xf32> to vector<2x16x16xbf16>
    "tpu.trace_start"() <{level = 10 : i32, message = "bqk,bkd->bqd"}> : () -> ()
    %cst_17 = arith.constant dense<0.000000e+00> : vector<2x16x8xf32>
    %53 = tpu.matmul %52, %40, %cst_17 {dimension_numbers = #tpu.dot_dimension_numbers<[2], [1], [1], [2], [0, 0, 0, 1, 1, 2], [0], [0]>} : vector<2x16x16xbf16>, vector<2x16x8xbf16>, vector<2x16x8xf32> -> vector<2x16x8xf32>
    "tpu.trace_stop"() : () -> ()
    %54 = vector.shape_cast %53 : vector<2x16x8xf32> to vector<32x8xf32>
    %55 = arith.truncf %54 : vector<32x8xf32> to vector<32x8xbf16>
    %56 = vector.extract_strided_slice %9 {offsets = [8, 0], sizes = [8, 32], strides = [1, 1]} : vector<32x32xbf16> to vector<8x32xbf16>
    %cst_18 = arith.constant dense<0.000000e+00> : vector<32x32xf32>
    %57 = tpu.matmul %55, %56, %cst_18 {dimension_numbers = #tpu.dot_dimension_numbers<[1], [0], [0], [1], [0, 0, 1, 1], [], []>} : vector<32x8xbf16>, vector<8x32xbf16>, vector<32x32xf32> -> vector<32x32xf32>
    %58 = arith.addf %34, %57 : vector<32x32xf32>
    %59 = vector.extract_strided_slice %8 {offsets = [0, 0, 16], sizes = [2, 16, 8], strides = [1, 1, 1]} : vector<2x16x96xf32> to vector<2x16x8xf32>
    %60 = arith.truncf %59 : vector<2x16x8xf32> to vector<2x16x8xbf16>
    %61 = vector.extract_strided_slice %8 {offsets = [0, 0, 48], sizes = [2, 16, 8], strides = [1, 1, 1]} : vector<2x16x96xf32> to vector<2x16x8xf32>
    %62 = arith.truncf %61 : vector<2x16x8xf32> to vector<2x16x8xbf16>
    %63 = vector.extract_strided_slice %8 {offsets = [0, 0, 80], sizes = [2, 16, 8], strides = [1, 1, 1]} : vector<2x16x96xf32> to vector<2x16x8xf32>
    %64 = arith.truncf %63 : vector<2x16x8xf32> to vector<2x16x8xbf16>
    "tpu.trace_start"() <{level = 10 : i32, message = "bqd,bkd->bqk"}> : () -> ()
    %cst_19 = arith.constant dense<0.000000e+00> : vector<2x16x16xf32>
    %65 = tpu.matmul %60, %62, %cst_19 {dimension_numbers = #tpu.dot_dimension_numbers<[2], [2], [1], [1], [0, 0, 0, 1, 1, 1], [0], [0]>} : vector<2x16x8xbf16>, vector<2x16x8xbf16>, vector<2x16x16xf32> -> vector<2x16x16xf32>
    "tpu.trace_stop"() : () -> ()
    %cst_20 = arith.constant dense<0xFF800000> : vector<2x16xf32>
    %66 = vector.multi_reduction <maximumf>, %65, %cst_20 [2] : vector<2x16x16xf32> to vector<2x16xf32>
    %67 = vector.shape_cast %66 : vector<2x16xf32> to vector<2x16x1xf32>
    %68 = vector.broadcast %67 : vector<2x16x1xf32> to vector<2x16x16xf32>
    %69 = arith.subf %65, %68 : vector<2x16x16xf32>
    %70 = math.exp %69 : vector<2x16x16xf32>
    %cst_21 = arith.constant dense<0.000000e+00> : vector<2x16xf32>
    %71 = vector.multi_reduction <add>, %70, %cst_21 [2] : vector<2x16x16xf32> to vector<2x16xf32>
    %72 = vector.shape_cast %71 : vector<2x16xf32> to vector<2x16x1xf32>
    %73 = tpu.reciprocal %72 {approx = true} : vector<2x16x1xf32> -> vector<2x16x1xf32>
    %74 = vector.broadcast %73 : vector<2x16x1xf32> to vector<2x16x16xf32>
    %75 = arith.mulf %70, %74 : vector<2x16x16xf32>
    %76 = arith.truncf %75 : vector<2x16x16xf32> to vector<2x16x16xbf16>
    "tpu.trace_start"() <{level = 10 : i32, message = "bqk,bkd->bqd"}> : () -> ()
    %cst_22 = arith.constant dense<0.000000e+00> : vector<2x16x8xf32>
    %77 = tpu.matmul %76, %64, %cst_22 {dimension_numbers = #tpu.dot_dimension_numbers<[2], [1], [1], [2], [0, 0, 0, 1, 1, 2], [0], [0]>} : vector<2x16x16xbf16>, vector<2x16x8xbf16>, vector<2x16x8xf32> -> vector<2x16x8xf32>
    "tpu.trace_stop"() : () -> ()
    %78 = vector.shape_cast %77 : vector<2x16x8xf32> to vector<32x8xf32>
    %79 = arith.truncf %78 : vector<32x8xf32> to vector<32x8xbf16>
    %80 = vector.extract_strided_slice %9 {offsets = [16, 0], sizes = [8, 32], strides = [1, 1]} : vector<32x32xbf16> to vector<8x32xbf16>
    %cst_23 = arith.constant dense<0.000000e+00> : vector<32x32xf32>
    %81 = tpu.matmul %79, %80, %cst_23 {dimension_numbers = #tpu.dot_dimension_numbers<[1], [0], [0], [1], [0, 0, 1, 1], [], []>} : vector<32x8xbf16>, vector<8x32xbf16>, vector<32x32xf32> -> vector<32x32xf32>
    %82 = arith.addf %58, %81 : vector<32x32xf32>
    %83 = vector.extract_strided_slice %8 {offsets = [0, 0, 24], sizes = [2, 16, 8], strides = [1, 1, 1]} : vector<2x16x96xf32> to vector<2x16x8xf32>
    %84 = arith.truncf %83 : vector<2x16x8xf32> to vector<2x16x8xbf16>
    %85 = vector.extract_strided_slice %8 {offsets = [0, 0, 56], sizes = [2, 16, 8], strides = [1, 1, 1]} : vector<2x16x96xf32> to vector<2x16x8xf32>
    %86 = arith.truncf %85 : vector<2x16x8xf32> to vector<2x16x8xbf16>
    %87 = vector.extract_strided_slice %8 {offsets = [0, 0, 88], sizes = [2, 16, 8], strides = [1, 1, 1]} : vector<2x16x96xf32> to vector<2x16x8xf32>
    %88 = arith.truncf %87 : vector<2x16x8xf32> to vector<2x16x8xbf16>
    "tpu.trace_start"() <{level = 10 : i32, message = "bqd,bkd->bqk"}> : () -> ()
    %cst_24 = arith.constant dense<0.000000e+00> : vector<2x16x16xf32>
    %89 = tpu.matmul %84, %86, %cst_24 {dimension_numbers = #tpu.dot_dimension_numbers<[2], [2], [1], [1], [0, 0, 0, 1, 1, 1], [0], [0]>} : vector<2x16x8xbf16>, vector<2x16x8xbf16>, vector<2x16x16xf32> -> vector<2x16x16xf32>
    "tpu.trace_stop"() : () -> ()
    %cst_25 = arith.constant dense<0xFF800000> : vector<2x16xf32>
    %90 = vector.multi_reduction <maximumf>, %89, %cst_25 [2] : vector<2x16x16xf32> to vector<2x16xf32>
    %91 = vector.shape_cast %90 : vector<2x16xf32> to vector<2x16x1xf32>
    %92 = vector.broadcast %91 : vector<2x16x1xf32> to vector<2x16x16xf32>
    %93 = arith.subf %89, %92 : vector<2x16x16xf32>
    %94 = math.exp %93 : vector<2x16x16xf32>
    %cst_26 = arith.constant dense<0.000000e+00> : vector<2x16xf32>
    %95 = vector.multi_reduction <add>, %94, %cst_26 [2] : vector<2x16x16xf32> to vector<2x16xf32>
    %96 = vector.shape_cast %95 : vector<2x16xf32> to vector<2x16x1xf32>
    %97 = tpu.reciprocal %96 {approx = true} : vector<2x16x1xf32> -> vector<2x16x1xf32>
    %98 = vector.broadcast %97 : vector<2x16x1xf32> to vector<2x16x16xf32>
    %99 = arith.mulf %94, %98 : vector<2x16x16xf32>
    %100 = arith.truncf %99 : vector<2x16x16xf32> to vector<2x16x16xbf16>
    "tpu.trace_start"() <{level = 10 : i32, message = "bqk,bkd->bqd"}> : () -> ()
    %cst_27 = arith.constant dense<0.000000e+00> : vector<2x16x8xf32>
    %101 = tpu.matmul %100, %88, %cst_27 {dimension_numbers = #tpu.dot_dimension_numbers<[2], [1], [1], [2], [0, 0, 0, 1, 1, 2], [0], [0]>} : vector<2x16x16xbf16>, vector<2x16x8xbf16>, vector<2x16x8xf32> -> vector<2x16x8xf32>
    "tpu.trace_stop"() : () -> ()
    %102 = vector.shape_cast %101 : vector<2x16x8xf32> to vector<32x8xf32>
    %103 = arith.truncf %102 : vector<32x8xf32> to vector<32x8xbf16>
    %104 = vector.extract_strided_slice %9 {offsets = [24, 0], sizes = [8, 32], strides = [1, 1]} : vector<32x32xbf16> to vector<8x32xbf16>
    %cst_28 = arith.constant dense<0.000000e+00> : vector<32x32xf32>
    %105 = tpu.matmul %103, %104, %cst_28 {dimension_numbers = #tpu.dot_dimension_numbers<[1], [0], [0], [1], [0, 0, 1, 1], [], []>} : vector<32x8xbf16>, vector<8x32xbf16>, vector<32x32xf32> -> vector<32x32xf32>
    %106 = arith.addf %82, %105 : vector<32x32xf32>
    %c0_29 = arith.constant 0 : index
    %c0_30 = arith.constant 0 : index
    %107 = vector.load %arg4[%c0_29, %c0_30] : memref<1x32xf32, #tpu.memory_space<vmem>>, vector<1x32xf32>
    %108 = vector.broadcast %107 : vector<1x32xf32> to vector<32x32xf32>
    %109 = arith.addf %106, %108 : vector<32x32xf32>
    %110 = arith.addf %1, %109 : vector<32x32xf32>
    %cst_31 = arith.constant dense<0.000000e+00> : vector<32xf32>
    %111 = vector.multi_reduction <add>, %110, %cst_31 [0] : vector<32x32xf32> to vector<32xf32>
    %112 = vector.shape_cast %111 : vector<32xf32> to vector<1x32xf32>
    %cst_32 = arith.constant 3.200000e+01 : f32
    %113 = vector.broadcast %cst_32 : f32 to vector<1x32xf32>
    %114 = arith.divf %112, %113 : vector<1x32xf32>
    %115 = vector.broadcast %114 : vector<1x32xf32> to vector<32x32xf32>
    %116 = arith.subf %110, %115 : vector<32x32xf32>
    %117 = arith.mulf %116, %116 : vector<32x32xf32>
    %cst_33 = arith.constant dense<0.000000e+00> : vector<32xf32>
    %118 = vector.multi_reduction <add>, %117, %cst_33 [0] : vector<32x32xf32> to vector<32xf32>
    %119 = vector.shape_cast %118 : vector<32xf32> to vector<1x32xf32>
    %cst_34 = arith.constant 3.200000e+01 : f32
    %120 = vector.broadcast %cst_34 : f32 to vector<1x32xf32>
    %121 = arith.divf %119, %120 : vector<1x32xf32>
    %c0_35 = arith.constant 0 : index
    %c0_36 = arith.constant 0 : index
    %122 = vector.load %arg5[%c0_35, %c0_36] : memref<1x32xf32, #tpu.memory_space<vmem>>, vector<1x32xf32>
    %cst_37 = arith.constant 9.99999974E-6 : f32
    %123 = vector.broadcast %cst_37 : f32 to vector<1x32xf32>
    %124 = arith.addf %121, %123 : vector<1x32xf32>
    %125 = math.rsqrt %124 : vector<1x32xf32>
    %126 = arith.mulf %122, %125 : vector<1x32xf32>
    %127 = vector.broadcast %126 : vector<1x32xf32> to vector<32x32xf32>
    %128 = arith.mulf %116, %127 : vector<32x32xf32>
    %c0_38 = arith.constant 0 : index
    %c0_39 = arith.constant 0 : index
    %129 = vector.load %arg6[%c0_38, %c0_39] : memref<1x32xf32, #tpu.memory_space<vmem>>, vector<1x32xf32>
    %130 = vector.broadcast %129 : vector<1x32xf32> to vector<32x32xf32>
    %131 = arith.addf %128, %130 : vector<32x32xf32>
    %132 = arith.truncf %131 : vector<32x32xf32> to vector<32x32xbf16>
    %c0_40 = arith.constant 0 : index
    %c0_41 = arith.constant 0 : index
    %133 = vector.load %arg7[%c0_40, %c0_41] : memref<32x64xbf16, #tpu.memory_space<vmem>>, vector<32x64xbf16>
    %cst_42 = arith.constant dense<0.000000e+00> : vector<32x64xf32>
    %134 = tpu.matmul %132, %133, %cst_42 {dimension_numbers = #tpu.dot_dimension_numbers<[1], [0], [0], [1], [0, 0, 1, 1], [], []>} : vector<32x32xbf16>, vector<32x64xbf16>, vector<32x64xf32> -> vector<32x64xf32>
    %c0_43 = arith.constant 0 : index
    %c0_44 = arith.constant 0 : index
    %135 = vector.load %arg8[%c0_43, %c0_44] : memref<1x64xf32, #tpu.memory_space<vmem>>, vector<1x64xf32>
    %136 = vector.broadcast %135 : vector<1x64xf32> to vector<32x64xf32>
    %137 = arith.addf %134, %136 : vector<32x64xf32>
    %cst_45 = arith.constant 5.000000e-01 : f32
    %138 = vector.broadcast %cst_45 : f32 to vector<32x64xf32>
    %139 = arith.mulf %138, %137 : vector<32x64xf32>
    %cst_46 = arith.constant 0.707106769 : f32
    %140 = vector.broadcast %cst_46 : f32 to vector<32x64xf32>
    %141 = arith.mulf %137, %140 : vector<32x64xf32>
    %142 = math.erf %141 : vector<32x64xf32>
    %cst_47 = arith.constant 1.000000e+00 : f32
    %143 = vector.broadcast %cst_47 : f32 to vector<32x64xf32>
    %144 = arith.addf %143, %142 : vector<32x64xf32>
    %145 = arith.mulf %139, %144 : vector<32x64xf32>
    %146 = arith.truncf %145 : vector<32x64xf32> to vector<32x64xbf16>
    %c0_48 = arith.constant 0 : index
    %c0_49 = arith.constant 0 : index
    %147 = vector.load %arg9[%c0_48, %c0_49] : memref<64x32xbf16, #tpu.memory_space<vmem>>, vector<64x32xbf16>
    %cst_50 = arith.constant dense<0.000000e+00> : vector<32x32xf32>
    %148 = tpu.matmul %146, %147, %cst_50 {dimension_numbers = #tpu.dot_dimension_numbers<[1], [0], [0], [1], [0, 0, 1, 1], [], []>} : vector<32x64xbf16>, vector<64x32xbf16>, vector<32x32xf32> -> vector<32x32xf32>
    %c0_51 = arith.constant 0 : index
    %c0_52 = arith.constant 0 : index
    %149 = vector.load %arg10[%c0_51, %c0_52] : memref<1x32xf32, #tpu.memory_space<vmem>>, vector<1x32xf32>
    %150 = vector.broadcast %149 : vector<1x32xf32> to vector<32x32xf32>
    %151 = arith.addf %148, %150 : vector<32x32xf32>
    %152 = arith.addf %131, %151 : vector<32x32xf32>
    %cst_53 = arith.constant dense<0.000000e+00> : vector<32xf32>
    %153 = vector.multi_reduction <add>, %152, %cst_53 [0] : vector<32x32xf32> to vector<32xf32>
    %154 = vector.shape_cast %153 : vector<32xf32> to vector<1x32xf32>
    %cst_54 = arith.constant 3.200000e+01 : f32
    %155 = vector.broadcast %cst_54 : f32 to vector<1x32xf32>
    %156 = arith.divf %154, %155 : vector<1x32xf32>
    %157 = vector.broadcast %156 : vector<1x32xf32> to vector<32x32xf32>
    %158 = arith.subf %152, %157 : vector<32x32xf32>
    %159 = arith.mulf %158, %158 : vector<32x32xf32>
    %cst_55 = arith.constant dense<0.000000e+00> : vector<32xf32>
    %160 = vector.multi_reduction <add>, %159, %cst_55 [0] : vector<32x32xf32> to vector<32xf32>
    %161 = vector.shape_cast %160 : vector<32xf32> to vector<1x32xf32>
    %cst_56 = arith.constant 3.200000e+01 : f32
    %162 = vector.broadcast %cst_56 : f32 to vector<1x32xf32>
    %163 = arith.divf %161, %162 : vector<1x32xf32>
    %c0_57 = arith.constant 0 : index
    %c0_58 = arith.constant 0 : index
    %164 = vector.load %arg11[%c0_57, %c0_58] : memref<1x32xf32, #tpu.memory_space<vmem>>, vector<1x32xf32>
    %cst_59 = arith.constant 9.99999974E-6 : f32
    %165 = vector.broadcast %cst_59 : f32 to vector<1x32xf32>
    %166 = arith.addf %163, %165 : vector<1x32xf32>
    %167 = math.rsqrt %166 : vector<1x32xf32>
    %168 = arith.mulf %164, %167 : vector<1x32xf32>
    %169 = vector.broadcast %168 : vector<1x32xf32> to vector<32x32xf32>
    %170 = arith.mulf %158, %169 : vector<32x32xf32>
    %c0_60 = arith.constant 0 : index
    %c0_61 = arith.constant 0 : index
    %171 = vector.load %arg12[%c0_60, %c0_61] : memref<1x32xf32, #tpu.memory_space<vmem>>, vector<1x32xf32>
    %172 = vector.broadcast %171 : vector<1x32xf32> to vector<32x32xf32>
    %173 = arith.addf %170, %172 : vector<32x32xf32>
    %174 = vector.shape_cast %173 : vector<32x32xf32> to vector<2x16x32xf32>
    %c0_62 = arith.constant 0 : index
    %c0_63 = arith.constant 0 : index
    %c0_64 = arith.constant 0 : index
    %175 = vector.load %arg13[%c0_62, %c0_63, %c0_64] : memref<2x16x32xf32, #tpu.memory_space<vmem>>, vector<2x16x32xf32>
    tpu.vector_store %arg13[%c0_62, %c0_63, %c0_64], %174 {strides = array<i32>} : memref<2x16x32xf32, #tpu.memory_space<vmem>>, vector<2x16x32xf32>,
    return
  }
}

</mosaic_0001>

<llo_original>
// kernel: tpu_custom_call.1
$region0: #{tpu_custom_call.1}
  #allocation0 [shape = 'u32[]', space=smem, size = 0x4, offset = 0x4, fixed_abs, tag = 'smem constant byte address 0x4 - core index']
  #allocation1 [shape = 'u32[144,128]{1,0:T(1,128)}', space=vmem, size = 0x12000, scoped, tag = 'internal scratch']
  %s0 = inlined_call_operand.vmem [shape: f32[2,16,32], index: 0, kind: input, shape index: {}]
  %s1 = inlined_call_operand.vmem [shape: bf16[32,96], index: 1, kind: input, shape index: {}]
  %s2 = inlined_call_operand.vmem [shape: f32[1,96], index: 2, kind: input, shape index: {}]
  %s3 = inlined_call_operand.hbm [shape: bf16[32,32], index: 3, kind: input, shape index: {}]
  %s4 = inlined_call_operand.vmem [shape: f32[1,32], index: 4, kind: input, shape index: {}]
  %s5 = inlined_call_operand.vmem [shape: f32[1,32], index: 5, kind: input, shape index: {}]
  %s6 = inlined_call_operand.vmem [shape: f32[1,32], index: 6, kind: input, shape index: {}]
  %s7 = inlined_call_operand.hbm [shape: bf16[32,64], index: 7, kind: input, shape index: {}]
  %s8 = inlined_call_operand.vmem [shape: f32[1,64], index: 8, kind: input, shape index: {}]
  %s9 = inlined_call_operand.vmem [shape: bf16[64,32], index: 9, kind: input, shape index: {}]
  %s10 = inlined_call_operand.vmem [shape: f32[1,32], index: 10, kind: input, shape index: {}]
  %s11 = inlined_call_operand.vmem [shape: f32[1,32], index: 11, kind: input, shape index: {}]
  %s12 = inlined_call_operand.vmem [shape: f32[1,32], index: 12, kind: input, shape index: {}]
  %s13 = inlined_call_operand.hbm [shape: f32[2,16,32], index: 13, kind: output, shape index: {}]
  %s14 = sld [smem:[#allocation0]]
  $region70: #{tpu_custom_call.1} parent=0
    _
  %s16 = ssub.s32 1, %s14
  %s17 = scalar_select 0, %s16, %s14
  $region1: #{tpu_custom_call.1} parent=0
    #allocation2 [shape = 'u8[8192]{0}', space=vmem, size = 0x2000, scoped, tag = 'input window, operand 3, single buffered']
    #allocation3 [shape = 's32[1]{0}', space=sflag, size = 0x4, scoped, tag = 'scoped memory for tpu_custom_call.1']
    #allocation4 [shape = 's32[1]{0}', space=sflag, size = 0x4, scoped, tag = 'scoped memory for tpu_custom_call.1']
    #allocation5 [shape = 'u8[8192]{0}', space=vmem, size = 0x2000, scoped, tag = 'input window, operand 7, single buffered']
    #allocation6 [shape = 's32[1]{0}', space=sflag, size = 0x4, scoped, tag = 'scoped memory for tpu_custom_call.1']
    #allocation7 [shape = 'u8[16384]{0}', space=vmem, size = 0x4000, scoped, tag = 'output window, operand 0, single buffered']
    %18 = vsyncpa [#allocation3], 0
    %19 = vsyncpa [#allocation6], 0
    %20 = vsyncpa [#allocation4], 0
    // Predicated region
    $region2: #{tpu_custom_call.1} parent=1 // pred_check
      _
    $region3: #{tpu_custom_call.1} parent=1 // pred_check_branch
      %22 = sbr.rel (0) target = $region5
    $region4: #{tpu_custom_call.1} parent=1 // pred_region
      _
    $region5: #{tpu_custom_call.1} parent=1 // pred_fallthru
      _
    // Predicated region
    $region6: #{tpu_custom_call.1} parent=1 // pred_check
      _
    $region7: #{tpu_custom_call.1} parent=1 // pred_check_branch
      %24 = sbr.rel (0) target = $region9
    $region8: #{tpu_custom_call.1} parent=1 // pred_region
      _
    $region9: #{tpu_custom_call.1} parent=1 // pred_fallthru
      _
    // Predicated region
    $region10: #{tpu_custom_call.1} parent=1 // pred_check
      _
    $region11: #{tpu_custom_call.1} parent=1 // pred_check_branch
      %26 = sbr.rel (0) target = $region13
    $region12: #{tpu_custom_call.1} parent=1 // pred_region
      _
    $region13: #{tpu_custom_call.1} parent=1 // pred_fallthru
      _
    // Predicated region
    $region14: #{tpu_custom_call.1} parent=1 // pred_check
      _
    $region15: #{tpu_custom_call.1} parent=1 // pred_check_branch
      %28 = sbr.rel (0) target = $region17
    $region16: #{tpu_custom_call.1} parent=1 // pred_region
      %s30 = ssub.s32 256, 256
      %31 = vsyncadd [#allocation3], %s30
      %s32 = sshll.u32 [#allocation2], 4
      %s33 = int_to_ptr.vmem [resolvable:$true] %s32
      %38 = dma.hbm_to_vmem [thread:$0]  %s3, 256, %s33, [#allocation3], 64, 64, 4
    $region17: #{tpu_custom_call.1} parent=1 // pred_fallthru
      _
    // Predicated region
    $region18: #{tpu_custom_call.1} parent=1 // pred_check
      _
    $region19: #{tpu_custom_call.1} parent=1 // pred_check_branch
      %40 = sbr.rel (0) target = $region21
    $region20: #{tpu_custom_call.1} parent=1 // pred_region
      _
    $region21: #{tpu_custom_call.1} parent=1 // pred_fallthru
      _
    // Predicated region
    $region22: #{tpu_custom_call.1} parent=1 // pred_check
      _
    $region23: #{tpu_custom_call.1} parent=1 // pred_check_branch
      %42 = sbr.rel (0) target = $region25
    $region24: #{tpu_custom_call.1} parent=1 // pred_region
      _
    $region25: #{tpu_custom_call.1} parent=1 // pred_fallthru
      _
    // Predicated region
    $region26: #{tpu_custom_call.1} parent=1 // pred_check
      _
    $region27: #{tpu_custom_call.1} parent=1 // pred_check_branch
      %44 = sbr.rel (0) target = $region29
    $region28: #{tpu_custom_call.1} parent=1 // pred_region
      _
    $region29: #{tpu_custom_call.1} parent=1 // pred_fallthru
      _
    // Predicated region
    $region30: #{tpu_custom_call.1} parent=1 // pred_check
      _
    $region31: #{tpu_custom_call.1} parent=1 // pred_check_branch
      %46 = sbr.rel (0) target = $region33
    $region32: #{tpu_custom_call.1} parent=1 // pred_region
      %s48 = ssub.s32 256, 256
      %49 = vsyncadd [#allocation6], %s48
      %s50 = sshll.u32 [#allocation5], 4
      %s51 = int_to_ptr.vmem [resolvable:$true] %s50
      %56 = dma.hbm_to_vmem [thread:$0]  %s7, 256, %s51, [#allocation6], 64, 64, 4
    $region33: #{tpu_custom_call.1} parent=1 // pred_fallthru
      _
    // Predicated region
    $region34: #{tpu_custom_call.1} parent=1 // pred_check
      _
    $region35: #{tpu_custom_call.1} parent=1 // pred_check_branch
      %58 = sbr.rel (0) target = $region37
    $region36: #{tpu_custom_call.1} parent=1 // pred_region
      _
    $region37: #{tpu_custom_call.1} parent=1 // pred_fallthru
      _
    // Predicated region
    $region38: #{tpu_custom_call.1} parent=1 // pred_check
      _
    $region39: #{tpu_custom_call.1} parent=1 // pred_check_branch
      %60 = sbr.rel (0) target = $region41
    $region40: #{tpu_custom_call.1} parent=1 // pred_region
      _
    $region41: #{tpu_custom_call.1} parent=1 // pred_fallthru
      _
    // Predicated region
    $region42: #{tpu_custom_call.1} parent=1 // pred_check
      _
    $region43: #{tpu_custom_call.1} parent=1 // pred_check_branch
      %62 = sbr.rel (0) target = $region45
    $region44: #{tpu_custom_call.1} parent=1 // pred_region
      _
    $region45: #{tpu_custom_call.1} parent=1 // pred_fallthru
      _
    // Predicated region
    $region46: #{tpu_custom_call.1} parent=1 // pred_check
      _
    $region47: #{tpu_custom_call.1} parent=1 // pred_check_branch
      %64 = sbr.rel (0) target = $region49
    $region48: #{tpu_custom_call.1} parent=1 // pred_region
      _
    $region49: #{tpu_custom_call.1} parent=1 // pred_fallthru
      _
    // Predicated region
    $region50: #{tpu_custom_call.1} parent=1 // pred_check
      _
    $region51: #{tpu_custom_call.1} parent=1 // pred_check_branch
      %66 = sbr.rel (0) target = $region53
    $region52: #{tpu_custom_call.1} parent=1 // pred_region
      _
    $region53: #{tpu_custom_call.1} parent=1 // pred_fallthru
      _
    // Predicated region
    $region54: #{tpu_custom_call.1} parent=1 // pred_check
      _
    $region55: #{tpu_custom_call.1} parent=1 // pred_check_branch
      %68 = sbr.rel (0) target = $region57
    $region56: #{tpu_custom_call.1} parent=1 // pred_region
      %69 = dma.done [#allocation3], 256
    $region57: #{tpu_custom_call.1} parent=1 // pred_fallthru
      _
    // Predicated region
    $region58: #{tpu_custom_call.1} parent=1 // pred_check
      _
    $region59: #{tpu_custom_call.1} parent=1 // pred_check_branch
      %71 = sbr.rel (0) target = $region61
    $region60: #{tpu_custom_call.1} parent=1 // pred_region
      %72 = dma.done [#allocation6], 256
    $region61: #{tpu_custom_call.1} parent=1 // pred_fallthru
      _
    %v74 = vld [vmem:[%s0] sm:$0xff]
    %v75 = vld [vmem:[%s0 + $0x8] sm:$0xff]
    %v76 = vld [vmem:[%s0 + $0x10] sm:$0xff]
    %v77 = vld [vmem:[%s0 + $0x18] sm:$0xff]
    %v78 = vpack.c.bf16 %v75, %v74
    %v79 = vpack.c.bf16 %v77, %v76
    %v80 = vld [vmem:[%s1] sm:$0xf]
    %v81 = vld [vmem:[%s1 + $0x4] sm:$0xf]
    %v82 = vld [vmem:[%s1 + $0x8] sm:$0xf]
    %v83 = vld [vmem:[%s1 + $0xc] sm:$0xf]
    %v84 = vld [vmem:[%s2] sm:$0x1]
    %v86 = vlaneseq
    %v87 = vshrl.u32 %v86, 7
    %v88 = vsub.s32 0, %v87
    %v89 = vrot.slane %v84, %v88
    %v95 = vunpack.c.l.b16 %v80
    %v96 = vunpack.c.l.b16 %v81
    %v97 = vunpack.c.l.b16 %v82
    %v98 = vunpack.c.l.b16 %v83
    %v99 = vpack.c.b16 %v96, %v95
    %v100 = vpack.c.b16 %v98, %v97
    %vm103 = vcmask 261120
    %v105 = vsel %vm103, %v78, 0
    %v108 = vsel %vm103, %v79, 0
    %110 = vmatprep.subr.bf16.mxu0 0
    %111 = vmatpush1.bf16.msra.mxu0 %v99
    %112 = vmatprep.subr.bf16.mxu0 0
    %113 = vmatpush1.bf16.msra.mxu0 %v100
    %114 = vmatprep.subr.bf16.mxu0 0
    %115 = vmatpush1.bf16.msra.mxu0 0
    %116 = vmatprep.subr.bf16.mxu0 0
    %117 = vmatpush1.bf16.msra.mxu0 0
    %118 = vmatprep.subr.bf16.mxu0 0
    %119 = vmatpush1.bf16.msra.mxu0 0
    %120 = vmatprep.subr.bf16.mxu0 0
    %121 = vmatpush1.bf16.msra.mxu0 0
    %122 = vmatprep.subr.bf16.mxu0 0
    %123 = vmatpush1.bf16.msra.mxu0 0
    %124 = vmatprep.subr.bf16.mxu0 0
    %125 = vmatpush1.bf16.msra.mxu0 0
    %126 = vmatprep.subr.bf16.mxu0 0
    %127 = vmatpush1.bf16.msra.mxu0 0
    %128 = vmatprep.subr.bf16.mxu0 0
    %129 = vmatpush1.bf16.msra.mxu0 0
    %130 = vmatprep.subr.bf16.mxu0 0
    %131 = vmatpush1.bf16.msra.mxu0 0
    %132 = vmatprep.subr.bf16.mxu0 0
    %133 = vmatpush1.bf16.msra.mxu0 0
    %134 = vmatprep.subr.bf16.mxu0 0
    %135 = vmatpush1.bf16.msra.mxu0 0
    %136 = vmatprep.subr.bf16.mxu0 0
    %137 = vmatpush1.bf16.msra.mxu0 0
    %138 = vmatprep.subr.bf16.mxu0 0
    %139 = vmatpush1.bf16.msra.mxu0 0
    %140 = vmatprep.subr.bf16.mxu0 0
    %141 = vmatpush1.bf16.msra.mxu0 0
    %142 = vmatprep.mubr.bf16.mxu0 0
    %143 = vmatmul.mubr.bf16.gmra.mrb[0].mxu0 %v105
    %v144 = vpop.f32.mrb[0].mxu0
    %v145 = vadd.f32 %v89, %v144
    %v146 = vpop.f32.mrb[0].mxu0
    %v147 = vpop.f32.mrb[0].mxu0
    %v148 = vadd.f32 %v89, %v147
    %v149 = vpop.f32.mrb[0].mxu0
    %150 = vmatprep.mubr.bf16.mxu0 0
    %151 = vmatmul.mubr.bf16.gmra.mrb[0].mxu0 %v108
    %v152 = vpop.f32.mrb[0].mxu0
    %v153 = vadd.f32 %v89, %v152
    %v154 = vpop.f32.mrb[0].mxu0
    %v155 = vpop.f32.mrb[0].mxu0
    %v156 = vadd.f32 %v89, %v155
    %v157 = vpop.f32.mrb[0].mxu0
    %158 = vdwg.mxu0
    %v159 = vld [vmem:[#allocation2] sm:$0xf]
    %v160 = vld [vmem:[#allocation2 + $0x4] sm:$0xf]
    %v161 = vld [vmem:[#allocation2 + $0x8] sm:$0xf]
    %v162 = vld [vmem:[#allocation2 + $0xc] sm:$0xf]
    %v163 = vpack.c.bf16 %v148, %v145
    %v164 = vpack.c.bf16 %v156, %v153
    %166 = vrot.lane.b32.xlu0 %v163, 96
    %v167 = vpop.permute.xlu0 %166
    %vm168 = vcmask 64512
    %v170 = vsel %vm168, %v163, 0
    %v173 = vsel %vm168, %v167, 0
    %175 = vmatprep.subr.bf16.mxu0 0
    %176 = vmatpush1.bf16.xpose.msra.mxu0 %v173
    %177 = vmatprep.subr.bf16.mxu0 0
    %178 = vmatpush1.bf16.xpose.msra.mxu0 0
    %179 = vmatprep.subr.bf16.mxu0 0
    %180 = vmatpush1.bf16.xpose.msra.mxu0 0
    %181 = vmatprep.subr.bf16.mxu0 0
    %182 = vmatpush1.bf16.xpose.msra.mxu0 0
    %183 = vmatprep.subr.bf16.mxu0 0
    %184 = vmatpush1.bf16.xpose.msra.mxu0 0
    %185 = vmatprep.subr.bf16.mxu0 0
    %186 = vmatpush1.bf16.xpose.msra.mxu0 0
    %187 = vmatprep.subr.bf16.mxu0 0
    %188 = vmatpush1.bf16.xpose.msra.mxu0 0
    %189 = vmatprep.subr.bf16.mxu0 0
    %190 = vmatpush1.bf16.xpose.msra.mxu0 0
    %191 = vmatprep.subr.bf16.mxu0 0
    %192 = vmatpush1.bf16.xpose.msra.mxu0 0
    %193 = vmatprep.subr.bf16.mxu0 0
    %194 = vmatpush1.bf16.xpose.msra.mxu0 0
    %195 = vmatprep.subr.bf16.mxu0 0
    %196 = vmatpush1.bf16.xpose.msra.mxu0 0
    %197 = vmatprep.subr.bf16.mxu0 0
    %198 = vmatpush1.bf16.xpose.msra.mxu0 0
    %199 = vmatprep.subr.bf16.mxu0 0
    %200 = vmatpush1.bf16.xpose.msra.mxu0 0
    %201 = vmatprep.subr.bf16.mxu0 0
    %202 = vmatpush1.bf16.xpose.msra.mxu0 0
    %203 = vmatprep.subr.bf16.mxu0 0
    %204 = vmatpush1.bf16.xpose.msra.mxu0 0
    %205 = vmatprep.subr.bf16.mxu0 0
    %206 = vmatpush1.bf16.xpose.msra.mxu0 0
    %207 = vmatprep.mubr.bf16.mxu0 0
    %208 = vmatmul.mubr.bf16.gmra.mrb[0].mxu0 %v170
    %v209 = vpop.f32.mrb[0].mxu0
    %v210 = vadd.f32 0.0, %v209
    %v211 = vpop.f32.mrb[0].mxu0
    %v212 = vpop.f32.mrb[0].mxu0
    %v213 = vadd.f32 0.0, %v212
    %v214 = vpop.f32.mrb[0].mxu0
    %215 = vdwg.mxu0
    %217 = vrot.lane.b32.xlu0 %v164, 96
    %v218 = vpop.permute.xlu0 %217
    %v220 = vsel %vm168, %v164, 0
    %v223 = vsel %vm168, %v218, 0
    %225 = vmatprep.subr.bf16.mxu0 0
    %226 = vmatpush1.bf16.xpose.msra.mxu0 %v223
    %227 = vmatprep.subr.bf16.mxu0 0
    %228 = vmatpush1.bf16.xpose.msra.mxu0 0
    %229 = vmatprep.subr.bf16.mxu0 0
    %230 = vmatpush1.bf16.xpose.msra.mxu0 0
    %231 = vmatprep.subr.bf16.mxu0 0
    %232 = vmatpush1.bf16.xpose.msra.mxu0 0
    %233 = vmatprep.subr.bf16.mxu0 0
    %234 = vmatpush1.bf16.xpose.msra.mxu0 0
    %235 = vmatprep.subr.bf16.mxu0 0
    %236 = vmatpush1.bf16.xpose.msra.mxu0 0
    %237 = vmatprep.subr.bf16.mxu0 0
    %238 = vmatpush1.bf16.xpose.msra.mxu0 0
    %239 = vmatprep.subr.bf16.mxu0 0
    %240 = vmatpush1.bf16.xpose.msra.mxu0 0
    %241 = vmatprep.subr.bf16.mxu0 0
    %242 = vmatpush1.bf16.xpose.msra.mxu0 0
    %243 = vmatprep.subr.bf16.mxu0 0
    %244 = vmatpush1.bf16.xpose.msra.mxu0 0
    %245 = vmatprep.subr.bf16.mxu0 0
    %246 = vmatpush1.bf16.xpose.msra.mxu0 0
    %247 = vmatprep.subr.bf16.mxu0 0
    %248 = vmatpush1.bf16.xpose.msra.mxu0 0
    %249 = vmatprep.subr.bf16.mxu0 0
    %250 = vmatpush1.bf16.xpose.msra.mxu0 0
    %251 = vmatprep.subr.bf16.mxu0 0
    %252 = vmatpush1.bf16.xpose.msra.mxu0 0
    %253 = vmatprep.subr.bf16.mxu0 0
    %254 = vmatpush1.bf16.xpose.msra.mxu0 0
    %255 = vmatprep.subr.bf16.mxu0 0
    %256 = vmatpush1.bf16.xpose.msra.mxu0 0
    %257 = vmatprep.mubr.bf16.mxu0 0
    %258 = vmatmul.mubr.bf16.gmra.mrb[0].mxu0 %v220
    %v259 = vpop.f32.mrb[0].mxu0
    %v260 = vadd.f32 0.0, %v259
    %v261 = vpop.f32.mrb[0].mxu0
    %v262 = vpop.f32.mrb[0].mxu0
    %v263 = vadd.f32 0.0, %v262
    %v264 = vpop.f32.mrb[0].mxu0
    %265 = vdwg.mxu0
    %vm266 = vcmask 130048
    %v267 = vsel %vm266, %v210, -inf
    %268 = vmax.xlane.f32.xlu0 %v267
    %v269 = vpop.xlane.xlu0 %268
    %v270 = vsel %vm266, %v213, -inf
    %271 = vmax.xlane.f32.xlu0 %v270
    %v272 = vpop.xlane.xlu0 %271
    %v273 = vsel %vm266, %v260, -inf
    %274 = vmax.xlane.f32.xlu0 %v273
    %v275 = vpop.xlane.xlu0 %274
    %v276 = vsel %vm266, %v263, -inf
    %277 = vmax.xlane.f32.xlu0 %v276
    %v278 = vpop.xlane.xlu0 %277
    %v279 = vsub.f32 %v210, %v269
    %v280 = vsub.f32 %v213, %v272
    %v281 = vsub.f32 %v260, %v275
    %v282 = vsub.f32 %v263, %v278
    %v283 = vmul.f32 %v279, 1.442695
    %v284 = vpow.pop %v283
    %v285 = vmul.f32 %v280, 1.442695
    %v286 = vpow.pop %v285
    %v287 = vmul.f32 %v281, 1.442695
    %v288 = vpow.pop %v287
    %v289 = vmul.f32 %v282, 1.442695
    %v290 = vpow.pop %v289
    %v291 = vsel %vm266, %v284, 0.0
    %292 = vadd.xlane.f32.xlu0 %v291
    %v293 = vpop.xlane.xlu0 %292
    %v294 = vsel %vm266, %v286, 0.0
    %295 = vadd.xlane.f32.xlu0 %v294
    %v296 = vpop.xlane.xlu0 %295
    %v297 = vsel %vm266, %v288, 0.0
    %298 = vadd.xlane.f32.xlu0 %v297
    %v299 = vpop.xlane.xlu0 %298
    %v300 = vsel %vm266, %v290, 0.0
    %301 = vadd.xlane.f32.xlu0 %v300
    %v302 = vpop.xlane.xlu0 %301
    %v303 = vrcp.pop %v293
    %v304 = vrcp.pop %v296
    %v305 = vrcp.pop %v299
    %v306 = vrcp.pop %v302
    %v307 = vmul.f32 %v284, %v303
    %v308 = vmul.f32 %v286, %v304
    %v309 = vmul.f32 %v288, %v305
    %v310 = vmul.f32 %v290, %v306
    %v311 = vpack.c.bf16 %v308, %v307
    %v312 = vpack.c.bf16 %v310, %v309
    %313 = vrot.lane.b32.xlu0 %v163, 64
    %v314 = vpop.permute.xlu0 %313
    %v317 = vsel %vm266, %v311, 0
    %319 = vmatprep.subr.bf16.mxu0 0
    %320 = vmatpush1.bf16.msra.mxu0 %v314
    %321 = vmatprep.subr.bf16.mxu0 0
    %322 = vmatpush1.bf16.msra.mxu0 0
    %323 = vmatprep.subr.bf16.mxu0 0
    %324 = vmatpush1.bf16.msra.mxu0 0
    %325 = vmatprep.subr.bf16.mxu0 0
    %326 = vmatpush1.bf16.msra.mxu0 0
    %327 = vmatprep.subr.bf16.mxu0 0
    %328 = vmatpush1.bf16.msra.mxu0 0
    %329 = vmatprep.subr.bf16.mxu0 0
    %330 = vmatpush1.bf16.msra.mxu0 0
    %331 = vmatprep.subr.bf16.mxu0 0
    %332 = vmatpush1.bf16.msra.mxu0 0
    %333 = vmatprep.subr.bf16.mxu0 0
    %334 = vmatpush1.bf16.msra.mxu0 0
    %335 = vmatprep.subr.bf16.mxu0 0
    %336 = vmatpush1.bf16.msra.mxu0 0
    %337 = vmatprep.subr.bf16.mxu0 0
    %338 = vmatpush1.bf16.msra.mxu0 0
    %339 = vmatprep.subr.bf16.mxu0 0
    %340 = vmatpush1.bf16.msra.mxu0 0
    %341 = vmatprep.subr.bf16.mxu0 0
    %342 = vmatpush1.bf16.msra.mxu0 0
    %343 = vmatprep.subr.bf16.mxu0 0
    %344 = vmatpush1.bf16.msra.mxu0 0
    %345 = vmatprep.subr.bf16.mxu0 0
    %346 = vmatpush1.bf16.msra.mxu0 0
    %347 = vmatprep.subr.bf16.mxu0 0
    %348 = vmatpush1.bf16.msra.mxu0 0
    %349 = vmatprep.subr.bf16.mxu0 0
    %350 = vmatpush1.bf16.msra.mxu0 0
    %351 = vmatprep.mubr.bf16.mxu0 0
    %352 = vmatmul.mubr.bf16.gmra.mrb[0].mxu0 %v317
    %v353 = vpop.f32.mrb[0].mxu0
    %v354 = vadd.f32 0.0, %v353
    %v355 = vpop.f32.mrb[0].mxu0
    %v356 = vpop.f32.mrb[0].mxu0
    %v357 = vadd.f32 0.0, %v356
    %v358 = vpop.f32.mrb[0].mxu0
    %359 = vdwg.mxu0
    %360 = vrot.lane.b32.xlu0 %v164, 64
    %v361 = vpop.permute.xlu0 %360
    %v364 = vsel %vm266, %v312, 0
    %366 = vmatprep.subr.bf16.mxu0 0
    %367 = vmatpush1.bf16.msra.mxu0 %v361
    %368 = vmatprep.subr.bf16.mxu0 0
    %369 = vmatpush1.bf16.msra.mxu0 0
    %370 = vmatprep.subr.bf16.mxu0 0
    %371 = vmatpush1.bf16.msra.mxu0 0
    %372 = vmatprep.subr.bf16.mxu0 0
    %373 = vmatpush1.bf16.msra.mxu0 0
    %374 = vmatprep.subr.bf16.mxu0 0
    %375 = vmatpush1.bf16.msra.mxu0 0
    %376 = vmatprep.subr.bf16.mxu0 0
    %377 = vmatpush1.bf16.msra.mxu0 0
    %378 = vmatprep.subr.bf16.mxu0 0
    %379 = vmatpush1.bf16.msra.mxu0 0
    %380 = vmatprep.subr.bf16.mxu0 0
    %381 = vmatpush1.bf16.msra.mxu0 0
    %382 = vmatprep.subr.bf16.mxu0 0
    %383 = vmatpush1.bf16.msra.mxu0 0
    %384 = vmatprep.subr.bf16.mxu0 0
    %385 = vmatpush1.bf16.msra.mxu0 0
    %386 = vmatprep.subr.bf16.mxu0 0
    %387 = vmatpush1.bf16.msra.mxu0 0
    %388 = vmatprep.subr.bf16.mxu0 0
    %389 = vmatpush1.bf16.msra.mxu0 0
    %390 = vmatprep.subr.bf16.mxu0 0
    %391 = vmatpush1.bf16.msra.mxu0 0
    %392 = vmatprep.subr.bf16.mxu0 0
    %393 = vmatpush1.bf16.msra.mxu0 0
    %394 = vmatprep.subr.bf16.mxu0 0
    %395 = vmatpush1.bf16.msra.mxu0 0
    %396 = vmatprep.subr.bf16.mxu0 0
    %397 = vmatpush1.bf16.msra.mxu0 0
    %398 = vmatprep.mubr.bf16.mxu0 0
    %399 = vmatmul.mubr.bf16.gmra.mrb[0].mxu0 %v364
    %v400 = vpop.f32.mrb[0].mxu0
    %v401 = vadd.f32 0.0, %v400
    %v402 = vpop.f32.mrb[0].mxu0
    %v403 = vpop.f32.mrb[0].mxu0
    %v404 = vadd.f32 0.0, %v403
    %v405 = vpop.f32.mrb[0].mxu0
    %406 = vdwg.mxu0
    %v407 = vpack.c.bf16 %v357, %v354
    %v408 = vpack.c.bf16 %v404, %v401
    %409 = vrot.lane.b32.xlu0 %v163, 120
    %v410 = vpop.permute.xlu0 %409
    %411 = vrot.lane.b32.xlu0 %v163, 88
    %v412 = vpop.permute.xlu0 %411
    %v414 = vsel %vm168, %v410, 0
    %v417 = vsel %vm168, %v412, 0
    %419 = vmatprep.subr.bf16.mxu0 0
    %420 = vmatpush1.bf16.xpose.msra.mxu0 %v417
    %421 = vmatprep.subr.bf16.mxu0 0
    %422 = vmatpush1.bf16.xpose.msra.mxu0 0
    %423 = vmatprep.subr.bf16.mxu0 0
    %424 = vmatpush1.bf16.xpose.msra.mxu0 0
    %425 = vmatprep.subr.bf16.mxu0 0
    %426 = vmatpush1.bf16.xpose.msra.mxu0 0
    %427 = vmatprep.subr.bf16.mxu0 0
    %428 = vmatpush1.bf16.xpose.msra.mxu0 0
    %429 = vmatprep.subr.bf16.mxu0 0
    %430 = vmatpush1.bf16.xpose.msra.mxu0 0
    %431 = vmatprep.subr.bf16.mxu0 0
    %432 = vmatpush1.bf16.xpose.msra.mxu0 0
    %433 = vmatprep.subr.bf16.mxu0 0
    %434 = vmatpush1.bf16.xpose.msra.mxu0 0
    %435 = vmatprep.subr.bf16.mxu0 0
    %436 = vmatpush1.bf16.xpose.msra.mxu0 0
    %437 = vmatprep.subr.bf16.mxu0 0
    %438 = vmatpush1.bf16.xpose.msra.mxu0 0
    %439 = vmatprep.subr.bf16.mxu0 0
    %440 = vmatpush1.bf16.xpose.msra.mxu0 0
    %441 = vmatprep.subr.bf16.mxu0 0
    %442 = vmatpush1.bf16.xpose.msra.mxu0 0
    %443 = vmatprep.subr.bf16.mxu0 0
    %444 = vmatpush1.bf16.xpose.msra.mxu0 0
    %445 = vmatprep.subr.bf16.mxu0 0
    %446 = vmatpush1.bf16.xpose.msra.mxu0 0
    %447 = vmatprep.subr.bf16.mxu0 0
    %448 = vmatpush1.bf16.xpose.msra.mxu0 0
    %449 = vmatprep.subr.bf16.mxu0 0
    %450 = vmatpush1.bf16.xpose.msra.mxu0 0
    %451 = vmatprep.mubr.bf16.mxu0 0
    %452 = vmatmul.mubr.bf16.gmra.mrb[0].mxu0 %v414
    %v453 = vpop.f32.mrb[0].mxu0
    %v454 = vadd.f32 0.0, %v453
    %v455 = vpop.f32.mrb[0].mxu0
    %v456 = vpop.f32.mrb[0].mxu0
    %v457 = vadd.f32 0.0, %v456
    %v458 = vpop.f32.mrb[0].mxu0
    %459 = vdwg.mxu0
    %460 = vrot.lane.b32.xlu0 %v164, 120
    %v461 = vpop.permute.xlu0 %460
    %462 = vrot.lane.b32.xlu0 %v164, 88
    %v463 = vpop.permute.xlu0 %462
    %v465 = vsel %vm168, %v461, 0
    %v468 = vsel %vm168, %v463, 0
    %470 = vmatprep.subr.bf16.mxu0 0
    %471 = vmatpush1.bf16.xpose.msra.mxu0 %v468
    %472 = vmatprep.subr.bf16.mxu0 0
    %473 = vmatpush1.bf16.xpose.msra.mxu0 0
    %474 = vmatprep.subr.bf16.mxu0 0
    %475 = vmatpush1.bf16.xpose.msra.mxu0 0
    %476 = vmatprep.subr.bf16.mxu0 0
    %477 = vmatpush1.bf16.xpose.msra.mxu0 0
    %478 = vmatprep.subr.bf16.mxu0 0
    %479 = vmatpush1.bf16.xpose.msra.mxu0 0
    %480 = vmatprep.subr.bf16.mxu0 0
    %481 = vmatpush1.bf16.xpose.msra.mxu0 0
    %482 = vmatprep.subr.bf16.mxu0 0
    %483 = vmatpush1.bf16.xpose.msra.mxu0 0
    %484 = vmatprep.subr.bf16.mxu0 0
    %485 = vmatpush1.bf16.xpose.msra.mxu0 0
    %486 = vmatprep.subr.bf16.mxu0 0
    %487 = vmatpush1.bf16.xpose.msra.mxu0 0
    %488 = vmatprep.subr.bf16.mxu0 0
    %489 = vmatpush1.bf16.xpose.msra.mxu0 0
    %490 = vmatprep.subr.bf16.mxu0 0
    %491 = vmatpush1.bf16.xpose.msra.mxu0 0
    %492 = vmatprep.subr.bf16.mxu0 0
    %493 = vmatpush1.bf16.xpose.msra.mxu0 0
    %494 = vmatprep.subr.bf16.mxu0 0
    %495 = vmatpush1.bf16.xpose.msra.mxu0 0
    %496 = vmatprep.subr.bf16.mxu0 0
    %497 = vmatpush1.bf16.xpose.msra.mxu0 0
    %498 = vmatprep.subr.bf16.mxu0 0
    %499 = vmatpush1.bf16.xpose.msra.mxu0 0
    %500 = vmatprep.subr.bf16.mxu0 0
    %501 = vmatpush1.bf16.xpose.msra.mxu0 0
    %502 = vmatprep.mubr.bf16.mxu0 0
    %503 = vmatmul.mubr.bf16.gmra.mrb[0].mxu0 %v465
    %v504 = vpop.f32.mrb[0].mxu0
    %v505 = vadd.f32 0.0, %v504
    %v506 = vpop.f32.mrb[0].mxu0
    %v507 = vpop.f32.mrb[0].mxu0
    %v508 = vadd.f32 0.0, %v507
    %v509 = vpop.f32.mrb[0].mxu0
    %510 = vdwg.mxu0
    %v511 = vsel %vm266, %v454, -inf
    %512 = vmax.xlane.f32.xlu0 %v511
    %v513 = vpop.xlane.xlu0 %512
    %v514 = vsel %vm266, %v457, -inf
    %515 = vmax.xlane.f32.xlu0 %v514
    %v516 = vpop.xlane.xlu0 %515
    %v517 = vsel %vm266, %v505, -inf
    %518 = vmax.xlane.f32.xlu0 %v517
    %v519 = vpop.xlane.xlu0 %518
    %v520 = vsel %vm266, %v508, -inf
    %521 = vmax.xlane.f32.xlu0 %v520
    %v522 = vpop.xlane.xlu0 %521
    %v523 = vsub.f32 %v454, %v513
    %v524 = vsub.f32 %v457, %v516
    %v525 = vsub.f32 %v505, %v519
    %v526 = vsub.f32 %v508, %v522
    %v527 = vmul.f32 %v523, 1.442695
    %v528 = vpow.pop %v527
    %v529 = vmul.f32 %v524, 1.442695
    %v530 = vpow.pop %v529
    %v531 = vmul.f32 %v525, 1.442695
    %v532 = vpow.pop %v531
    %v533 = vmul.f32 %v526, 1.442695
    %v534 = vpow.pop %v533
    %v535 = vsel %vm266, %v528, 0.0
    %536 = vadd.xlane.f32.xlu0 %v535
    %v537 = vpop.xlane.xlu0 %536
    %v538 = vsel %vm266, %v530, 0.0
    %539 = vadd.xlane.f32.xlu0 %v538
    %v540 = vpop.xlane.xlu0 %539
    %v541 = vsel %vm266, %v532, 0.0
    %542 = vadd.xlane.f32.xlu0 %v541
    %v543 = vpop.xlane.xlu0 %542
    %v544 = vsel %vm266, %v534, 0.0
    %545 = vadd.xlane.f32.xlu0 %v544
    %v546 = vpop.xlane.xlu0 %545
    %v547 = vrcp.pop %v537
    %v548 = vrcp.pop %v540
    %v549 = vrcp.pop %v543
    %v550 = vrcp.pop %v546
    %v551 = vmul.f32 %v528, %v547
    %v552 = vmul.f32 %v530, %v548
    %v553 = vmul.f32 %v532, %v549
    %v554 = vmul.f32 %v534, %v550
    %v555 = vpack.c.bf16 %v552, %v551
    %v556 = vpack.c.bf16 %v554, %v553
    %557 = vrot.lane.b32.xlu0 %v163, 56
    %v558 = vpop.permute.xlu0 %557
    %v561 = vsel %vm266, %v555, 0
    %563 = vmatprep.subr.bf16.mxu0 0
    %564 = vmatpush1.bf16.msra.mxu0 %v558
    %565 = vmatprep.subr.bf16.mxu0 0
    %566 = vmatpush1.bf16.msra.mxu0 0
    %567 = vmatprep.subr.bf16.mxu0 0
    %568 = vmatpush1.bf16.msra.mxu0 0
    %569 = vmatprep.subr.bf16.mxu0 0
    %570 = vmatpush1.bf16.msra.mxu0 0
    %571 = vmatprep.subr.bf16.mxu0 0
    %572 = vmatpush1.bf16.msra.mxu0 0
    %573 = vmatprep.subr.bf16.mxu0 0
    %574 = vmatpush1.bf16.msra.mxu0 0
    %575 = vmatprep.subr.bf16.mxu0 0
    %576 = vmatpush1.bf16.msra.mxu0 0
    %577 = vmatprep.subr.bf16.mxu0 0
    %578 = vmatpush1.bf16.msra.mxu0 0
    %579 = vmatprep.subr.bf16.mxu0 0
    %580 = vmatpush1.bf16.msra.mxu0 0
    %581 = vmatprep.subr.bf16.mxu0 0
    %582 = vmatpush1.bf16.msra.mxu0 0
    %583 = vmatprep.subr.bf16.mxu0 0
    %584 = vmatpush1.bf16.msra.mxu0 0
    %585 = vmatprep.subr.bf16.mxu0 0
    %586 = vmatpush1.bf16.msra.mxu0 0
    %587 = vmatprep.subr.bf16.mxu0 0
    %588 = vmatpush1.bf16.msra.mxu0 0
    %589 = vmatprep.subr.bf16.mxu0 0
    %590 = vmatpush1.bf16.msra.mxu0 0
    %591 = vmatprep.subr.bf16.mxu0 0
    %592 = vmatpush1.bf16.msra.mxu0 0
    %593 = vmatprep.subr.bf16.mxu0 0
    %594 = vmatpush1.bf16.msra.mxu0 0
    %595 = vmatprep.mubr.bf16.mxu0 0
    %596 = vmatmul.mubr.bf16.gmra.mrb[0].mxu0 %v561
    %v597 = vpop.f32.mrb[0].mxu0
    %v598 = vadd.f32 0.0, %v597
    %v599 = vpop.f32.mrb[0].mxu0
    %v600 = vpop.f32.mrb[0].mxu0
    %v601 = vadd.f32 0.0, %v600
    %v602 = vpop.f32.mrb[0].mxu0
    %603 = vdwg.mxu0
    %604 = vrot.lane.b32.xlu0 %v164, 56
    %v605 = vpop.permute.xlu0 %604
    %v608 = vsel %vm266, %v556, 0
    %610 = vmatprep.subr.bf16.mxu0 0
    %611 = vmatpush1.bf16.msra.mxu0 %v605
    %612 = vmatprep.subr.bf16.mxu0 0
    %613 = vmatpush1.bf16.msra.mxu0 0
    %614 = vmatprep.subr.bf16.mxu0 0
    %615 = vmatpush1.bf16.msra.mxu0 0
    %616 = vmatprep.subr.bf16.mxu0 0
    %617 = vmatpush1.bf16.msra.mxu0 0
    %618 = vmatprep.subr.bf16.mxu0 0
    %619 = vmatpush1.bf16.msra.mxu0 0
    %620 = vmatprep.subr.bf16.mxu0 0
    %621 = vmatpush1.bf16.msra.mxu0 0
    %622 = vmatprep.subr.bf16.mxu0 0
    %623 = vmatpush1.bf16.msra.mxu0 0
    %624 = vmatprep.subr.bf16.mxu0 0
    %625 = vmatpush1.bf16.msra.mxu0 0
    %626 = vmatprep.subr.bf16.mxu0 0
    %627 = vmatpush1.bf16.msra.mxu0 0
    %628 = vmatprep.subr.bf16.mxu0 0
    %629 = vmatpush1.bf16.msra.mxu0 0
    %630 = vmatprep.subr.bf16.mxu0 0
    %631 = vmatpush1.bf16.msra.mxu0 0
    %632 = vmatprep.subr.bf16.mxu0 0
    %633 = vmatpush1.bf16.msra.mxu0 0
    %634 = vmatprep.subr.bf16.mxu0 0
    %635 = vmatpush1.bf16.msra.mxu0 0
    %636 = vmatprep.subr.bf16.mxu0 0
    %637 = vmatpush1.bf16.msra.mxu0 0
    %638 = vmatprep.subr.bf16.mxu0 0
    %639 = vmatpush1.bf16.msra.mxu0 0
    %640 = vmatprep.subr.bf16.mxu0 0
    %641 = vmatpush1.bf16.msra.mxu0 0
    %642 = vmatprep.mubr.bf16.mxu0 0
    %643 = vmatmul.mubr.bf16.gmra.mrb[0].mxu0 %v608
    %v644 = vpop.f32.mrb[0].mxu0
    %v645 = vadd.f32 0.0, %v644
    %v646 = vpop.f32.mrb[0].mxu0
    %v647 = vpop.f32.mrb[0].mxu0
    %v648 = vadd.f32 0.0, %v647
    %v649 = vpop.f32.mrb[0].mxu0
    %650 = vdwg.mxu0
    %v651 = vpack.c.bf16 %v601, %v598
    %v652 = vpack.c.bf16 %v648, %v645
    %v654 = vsel %vm168, %v651, 0
    %v657 = vsel %vm168, %v652, 0
    %vm659 = vcmask 1043456
    %v661 = vsel %vm659, %v160, 0
    %663 = vmatprep.subr.bf16.mxu0 0
    %664 = vmatpush1.bf16.msra.mxu0 %v661
    %665 = vmatprep.subr.bf16.mxu0 0
    %666 = vmatpush1.bf16.msra.mxu0 0
    %667 = vmatprep.subr.bf16.mxu0 0
    %668 = vmatpush1.bf16.msra.mxu0 0
    %669 = vmatprep.subr.bf16.mxu0 0
    %670 = vmatpush1.bf16.msra.mxu0 0
    %671 = vmatprep.subr.bf16.mxu0 0
    %672 = vmatpush1.bf16.msra.mxu0 0
    %673 = vmatprep.subr.bf16.mxu0 0
    %674 = vmatpush1.bf16.msra.mxu0 0
    %675 = vmatprep.subr.bf16.mxu0 0
    %676 = vmatpush1.bf16.msra.mxu0 0
    %677 = vmatprep.subr.bf16.mxu0 0
    %678 = vmatpush1.bf16.msra.mxu0 0
    %679 = vmatprep.subr.bf16.mxu0 0
    %680 = vmatpush1.bf16.msra.mxu0 0
    %681 = vmatprep.subr.bf16.mxu0 0
    %682 = vmatpush1.bf16.msra.mxu0 0
    %683 = vmatprep.subr.bf16.mxu0 0
    %684 = vmatpush1.bf16.msra.mxu0 0
    %685 = vmatprep.subr.bf16.mxu0 0
    %686 = vmatpush1.bf16.msra.mxu0 0
    %687 = vmatprep.subr.bf16.mxu0 0
    %688 = vmatpush1.bf16.msra.mxu0 0
    %689 = vmatprep.subr.bf16.mxu0 0
    %690 = vmatpush1.bf16.msra.mxu0 0
    %691 = vmatprep.subr.bf16.mxu0 0
    %692 = vmatpush1.bf16.msra.mxu0 0
    %693 = vmatprep.subr.bf16.mxu0 0
    %694 = vmatpush1.bf16.msra.mxu0 0
    %695 = vmatprep.mubr.bf16.mxu0 0
    %696 = vmatmul.mubr.bf16.gmra.mrb[0].mxu0 %v654
    %v697 = vpop.f32.mrb[0].mxu0
    %v698 = vadd.f32 0.0, %v697
    %v699 = vpop.f32.mrb[0].mxu0
    %v700 = vpop.f32.mrb[0].mxu0
    %v701 = vadd.f32 0.0, %v700
    %v702 = vpop.f32.mrb[0].mxu0
    %703 = vmatprep.mubr.bf16.mxu0 0
    %704 = vmatmul.mubr.bf16.gmra.mrb[0].mxu0 %v657
    %v705 = vpop.f32.mrb[0].mxu0
    %v706 = vadd.f32 0.0, %v705
    %v707 = vpop.f32.mrb[0].mxu0
    %v708 = vpop.f32.mrb[0].mxu0
    %v709 = vadd.f32 0.0, %v708
    %v710 = vpop.f32.mrb[0].mxu0
    %711 = vdwg.mxu0
    %v713 = vsel %vm168, %v407, 0
    %v716 = vsel %vm168, %v408, 0
    %v719 = vsel %vm659, %v159, 0
    %721 = vmatprep.subr.bf16.mxu0 0
    %722 = vmatpush1.bf16.msra.mxu0 %v719
    %723 = vmatprep.subr.bf16.mxu0 0
    %724 = vmatpush1.bf16.msra.mxu0 0
    %725 = vmatprep.subr.bf16.mxu0 0
    %726 = vmatpush1.bf16.msra.mxu0 0
    %727 = vmatprep.subr.bf16.mxu0 0
    %728 = vmatpush1.bf16.msra.mxu0 0
    %729 = vmatprep.subr.bf16.mxu0 0
    %730 = vmatpush1.bf16.msra.mxu0 0
    %731 = vmatprep.subr.bf16.mxu0 0
    %732 = vmatpush1.bf16.msra.mxu0 0
    %733 = vmatprep.subr.bf16.mxu0 0
    %734 = vmatpush1.bf16.msra.mxu0 0
    %735 = vmatprep.subr.bf16.mxu0 0
    %736 = vmatpush1.bf16.msra.mxu0 0
    %737 = vmatprep.subr.bf16.mxu0 0
    %738 = vmatpush1.bf16.msra.mxu0 0
    %739 = vmatprep.subr.bf16.mxu0 0
    %740 = vmatpush1.bf16.msra.mxu0 0
    %741 = vmatprep.subr.bf16.mxu0 0
    %742 = vmatpush1.bf16.msra.mxu0 0
    %743 = vmatprep.subr.bf16.mxu0 0
    %744 = vmatpush1.bf16.msra.mxu0 0
    %745 = vmatprep.subr.bf16.mxu0 0
    %746 = vmatpush1.bf16.msra.mxu0 0
    %747 = vmatprep.subr.bf16.mxu0 0
    %748 = vmatpush1.bf16.msra.mxu0 0
    %749 = vmatprep.subr.bf16.mxu0 0
    %750 = vmatpush1.bf16.msra.mxu0 0
    %751 = vmatprep.subr.bf16.mxu0 0
    %752 = vmatpush1.bf16.msra.mxu0 0
    %753 = vmatprep.mubr.bf16.mxu0 0
    %754 = vmatmul.mubr.bf16.gmra.mrb[0].mxu0 %v713
    %v755 = vpop.f32.mrb[0].mxu0
    %v756 = vadd.f32 %v698, %v755
    %v757 = vpop.f32.mrb[0].mxu0
    %v758 = vpop.f32.mrb[0].mxu0
    %v759 = vadd.f32 %v701, %v758
    %v760 = vpop.f32.mrb[0].mxu0
    %761 = vmatprep.mubr.bf16.mxu0 0
    %762 = vmatmul.mubr.bf16.gmra.mrb[0].mxu0 %v716
    %v763 = vpop.f32.mrb[0].mxu0
    %v764 = vadd.f32 %v706, %v763
    %v765 = vpop.f32.mrb[0].mxu0
    %v766 = vpop.f32.mrb[0].mxu0
    %v767 = vadd.f32 %v709, %v766
    %v768 = vpop.f32.mrb[0].mxu0
    %769 = vdwg.mxu0
    %770 = vrot.lane.b32.xlu0 %v163, 112
    %v771 = vpop.permute.xlu0 %770
    %772 = vrot.lane.b32.xlu0 %v163, 80
    %v773 = vpop.permute.xlu0 %772
    %v775 = vsel %vm168, %v771, 0
    %v778 = vsel %vm168, %v773, 0
    %780 = vmatprep.subr.bf16.mxu0 0
    %781 = vmatpush1.bf16.xpose.msra.mxu0 %v778
    %782 = vmatprep.subr.bf16.mxu0 0
    %783 = vmatpush1.bf16.xpose.msra.mxu0 0
    %784 = vmatprep.subr.bf16.mxu0 0
    %785 = vmatpush1.bf16.xpose.msra.mxu0 0
    %786 = vmatprep.subr.bf16.mxu0 0
    %787 = vmatpush1.bf16.xpose.msra.mxu0 0
    %788 = vmatprep.subr.bf16.mxu0 0
    %789 = vmatpush1.bf16.xpose.msra.mxu0 0
    %790 = vmatprep.subr.bf16.mxu0 0
    %791 = vmatpush1.bf16.xpose.msra.mxu0 0
    %792 = vmatprep.subr.bf16.mxu0 0
    %793 = vmatpush1.bf16.xpose.msra.mxu0 0
    %794 = vmatprep.subr.bf16.mxu0 0
    %795 = vmatpush1.bf16.xpose.msra.mxu0 0
    %796 = vmatprep.subr.bf16.mxu0 0
    %797 = vmatpush1.bf16.xpose.msra.mxu0 0
    %798 = vmatprep.subr.bf16.mxu0 0
    %799 = vmatpush1.bf16.xpose.msra.mxu0 0
    %800 = vmatprep.subr.bf16.mxu0 0
    %801 = vmatpush1.bf16.xpose.msra.mxu0 0
    %802 = vmatprep.subr.bf16.mxu0 0
    %803 = vmatpush1.bf16.xpose.msra.mxu0 0
    %804 = vmatprep.subr.bf16.mxu0 0
    %805 = vmatpush1.bf16.xpose.msra.mxu0 0
    %806 = vmatprep.subr.bf16.mxu0 0
    %807 = vmatpush1.bf16.xpose.msra.mxu0 0
    %808 = vmatprep.subr.bf16.mxu0 0
    %809 = vmatpush1.bf16.xpose.msra.mxu0 0
    %810 = vmatprep.subr.bf16.mxu0 0
    %811 = vmatpush1.bf16.xpose.msra.mxu0 0
    %812 = vmatprep.mubr.bf16.mxu0 0
    %813 = vmatmul.mubr.bf16.gmra.mrb[0].mxu0 %v775
    %v814 = vpop.f32.mrb[0].mxu0
    %v815 = vadd.f32 0.0, %v814
    %v816 = vpop.f32.mrb[0].mxu0
    %v817 = vpop.f32.mrb[0].mxu0
    %v818 = vadd.f32 0.0, %v817
    %v819 = vpop.f32.mrb[0].mxu0
    %820 = vdwg.mxu0
    %821 = vrot.lane.b32.xlu0 %v164, 112
    %v822 = vpop.permute.xlu0 %821
    %823 = vrot.lane.b32.xlu0 %v164, 80
    %v824 = vpop.permute.xlu0 %823
    %v826 = vsel %vm168, %v822, 0
    %v829 = vsel %vm168, %v824, 0
    %831 = vmatprep.subr.bf16.mxu0 0
    %832 = vmatpush1.bf16.xpose.msra.mxu0 %v829
    %833 = vmatprep.subr.bf16.mxu0 0
    %834 = vmatpush1.bf16.xpose.msra.mxu0 0
    %835 = vmatprep.subr.bf16.mxu0 0
    %836 = vmatpush1.bf16.xpose.msra.mxu0 0
    %837 = vmatprep.subr.bf16.mxu0 0
    %838 = vmatpush1.bf16.xpose.msra.mxu0 0
    %839 = vmatprep.subr.bf16.mxu0 0
    %840 = vmatpush1.bf16.xpose.msra.mxu0 0
    %841 = vmatprep.subr.bf16.mxu0 0
    %842 = vmatpush1.bf16.xpose.msra.mxu0 0
    %843 = vmatprep.subr.bf16.mxu0 0
    %844 = vmatpush1.bf16.xpose.msra.mxu0 0
    %845 = vmatprep.subr.bf16.mxu0 0
    %846 = vmatpush1.bf16.xpose.msra.mxu0 0
    %847 = vmatprep.subr.bf16.mxu0 0
    %848 = vmatpush1.bf16.xpose.msra.mxu0 0
    %849 = vmatprep.subr.bf16.mxu0 0
    %850 = vmatpush1.bf16.xpose.msra.mxu0 0
    %851 = vmatprep.subr.bf16.mxu0 0
    %852 = vmatpush1.bf16.xpose.msra.mxu0 0
    %853 = vmatprep.subr.bf16.mxu0 0
    %854 = vmatpush1.bf16.xpose.msra.mxu0 0
    %855 = vmatprep.subr.bf16.mxu0 0
    %856 = vmatpush1.bf16.xpose.msra.mxu0 0
    %857 = vmatprep.subr.bf16.mxu0 0
    %858 = vmatpush1.bf16.xpose.msra.mxu0 0
    %859 = vmatprep.subr.bf16.mxu0 0
    %860 = vmatpush1.bf16.xpose.msra.mxu0 0
    %861 = vmatprep.subr.bf16.mxu0 0
    %862 = vmatpush1.bf16.xpose.msra.mxu0 0
    %863 = vmatprep.mubr.bf16.mxu0 0
    %864 = vmatmul.mubr.bf16.gmra.mrb[0].mxu0 %v826
    %v865 = vpop.f32.mrb[0].mxu0
    %v866 = vadd.f32 0.0, %v865
    %v867 = vpop.f32.mrb[0].mxu0
    %v868 = vpop.f32.mrb[0].mxu0
    %v869 = vadd.f32 0.0, %v868
    %v870 = vpop.f32.mrb[0].mxu0
    %871 = vdwg.mxu0
    %v872 = vsel %vm266, %v815, -inf
    %873 = vmax.xlane.f32.xlu0 %v872
    %v874 = vpop.xlane.xlu0 %873
    %v875 = vsel %vm266, %v818, -inf
    %876 = vmax.xlane.f32.xlu0 %v875
    %v877 = vpop.xlane.xlu0 %876
    %v878 = vsel %vm266, %v866, -inf
    %879 = vmax.xlane.f32.xlu0 %v878
    %v880 = vpop.xlane.xlu0 %879
    %v881 = vsel %vm266, %v869, -inf
    %882 = vmax.xlane.f32.xlu0 %v881
    %v883 = vpop.xlane.xlu0 %882
    %v884 = vsub.f32 %v815, %v874
    %v885 = vsub.f32 %v818, %v877
    %v886 = vsub.f32 %v866, %v880
    %v887 = vsub.f32 %v869, %v883
    %v888 = vmul.f32 %v884, 1.442695
    %v889 = vpow.pop %v888
    %v890 = vmul.f32 %v885, 1.442695
    %v891 = vpow.pop %v890
    %v892 = vmul.f32 %v886, 1.442695
    %v893 = vpow.pop %v892
    %v894 = vmul.f32 %v887, 1.442695
    %v895 = vpow.pop %v894
    %v896 = vsel %vm266, %v889, 0.0
    %897 = vadd.xlane.f32.xlu0 %v896
    %v898 = vpop.xlane.xlu0 %897
    %v899 = vsel %vm266, %v891, 0.0
    %900 = vadd.xlane.f32.xlu0 %v899
    %v901 = vpop.xlane.xlu0 %900
    %v902 = vsel %vm266, %v893, 0.0
    %903 = vadd.xlane.f32.xlu0 %v902
    %v904 = vpop.xlane.xlu0 %903
    %v905 = vsel %vm266, %v895, 0.0
    %906 = vadd.xlane.f32.xlu0 %v905
    %v907 = vpop.xlane.xlu0 %906
    %v908 = vrcp.pop %v898
    %v909 = vrcp.pop %v901
    %v910 = vrcp.pop %v904
    %v911 = vrcp.pop %v907
    %v912 = vmul.f32 %v889, %v908
    %v913 = vmul.f32 %v891, %v909
    %v914 = vmul.f32 %v893, %v910
    %v915 = vmul.f32 %v895, %v911
    %v916 = vpack.c.bf16 %v913, %v912
    %v917 = vpack.c.bf16 %v915, %v914
    %918 = vrot.lane.b32.xlu0 %v163, 48
    %v919 = vpop.permute.xlu0 %918
    %v922 = vsel %vm266, %v916, 0
    %924 = vmatprep.subr.bf16.mxu0 0
    %925 = vmatpush1.bf16.msra.mxu0 %v919
    %926 = vmatprep.subr.bf16.mxu0 0
    %927 = vmatpush1.bf16.msra.mxu0 0
    %928 = vmatprep.subr.bf16.mxu0 0
    %929 = vmatpush1.bf16.msra.mxu0 0
    %930 = vmatprep.subr.bf16.mxu0 0
    %931 = vmatpush1.bf16.msra.mxu0 0
    %932 = vmatprep.subr.bf16.mxu0 0
    %933 = vmatpush1.bf16.msra.mxu0 0
    %934 = vmatprep.subr.bf16.mxu0 0
    %935 = vmatpush1.bf16.msra.mxu0 0
    %936 = vmatprep.subr.bf16.mxu0 0
    %937 = vmatpush1.bf16.msra.mxu0 0
    %938 = vmatprep.subr.bf16.mxu0 0
    %939 = vmatpush1.bf16.msra.mxu0 0
    %940 = vmatprep.subr.bf16.mxu0 0
    %941 = vmatpush1.bf16.msra.mxu0 0
    %942 = vmatprep.subr.bf16.mxu0 0
    %943 = vmatpush1.bf16.msra.mxu0 0
    %944 = vmatprep.subr.bf16.mxu0 0
    %945 = vmatpush1.bf16.msra.mxu0 0
    %946 = vmatprep.subr.bf16.mxu0 0
    %947 = vmatpush1.bf16.msra.mxu0 0
    %948 = vmatprep.subr.bf16.mxu0 0
    %949 = vmatpush1.bf16.msra.mxu0 0
    %950 = vmatprep.subr.bf16.mxu0 0
    %951 = vmatpush1.bf16.msra.mxu0 0
    %952 = vmatprep.subr.bf16.mxu0 0
    %953 = vmatpush1.bf16.msra.mxu0 0
    %954 = vmatprep.subr.bf16.mxu0 0
    %955 = vmatpush1.bf16.msra.mxu0 0
    %956 = vmatprep.mubr.bf16.mxu0 0
    %957 = vmatmul.mubr.bf16.gmra.mrb[0].mxu0 %v922
    %v958 = vpop.f32.mrb[0].mxu0
    %v959 = vadd.f32 0.0, %v958
    %v960 = vpop.f32.mrb[0].mxu0
    %v961 = vpop.f32.mrb[0].mxu0
    %v962 = vadd.f32 0.0, %v961
    %v963 = vpop.f32.mrb[0].mxu0
    %964 = vdwg.mxu0
    %965 = vrot.lane.b32.xlu0 %v164, 48
    %v966 = vpop.permute.xlu0 %965
    %v969 = vsel %vm266, %v917, 0
    %971 = vmatprep.subr.bf16.mxu0 0
    %972 = vmatpush1.bf16.msra.mxu0 %v966
    %973 = vmatprep.subr.bf16.mxu0 0
    %974 = vmatpush1.bf16.msra.mxu0 0
    %975 = vmatprep.subr.bf16.mxu0 0
    %976 = vmatpush1.bf16.msra.mxu0 0
    %977 = vmatprep.subr.bf16.mxu0 0
    %978 = vmatpush1.bf16.msra.mxu0 0
    %979 = vmatprep.subr.bf16.mxu0 0
    %980 = vmatpush1.bf16.msra.mxu0 0
    %981 = vmatprep.subr.bf16.mxu0 0
    %982 = vmatpush1.bf16.msra.mxu0 0
    %983 = vmatprep.subr.bf16.mxu0 0
    %984 = vmatpush1.bf16.msra.mxu0 0
    %985 = vmatprep.subr.bf16.mxu0 0
    %986 = vmatpush1.bf16.msra.mxu0 0
    %987 = vmatprep.subr.bf16.mxu0 0
    %988 = vmatpush1.bf16.msra.mxu0 0
    %989 = vmatprep.subr.bf16.mxu0 0
    %990 = vmatpush1.bf16.msra.mxu0 0
    %991 = vmatprep.subr.bf16.mxu0 0
    %992 = vmatpush1.bf16.msra.mxu0 0
    %993 = vmatprep.subr.bf16.mxu0 0
    %994 = vmatpush1.bf16.msra.mxu0 0
    %995 = vmatprep.subr.bf16.mxu0 0
    %996 = vmatpush1.bf16.msra.mxu0 0
    %997 = vmatprep.subr.bf16.mxu0 0
    %998 = vmatpush1.bf16.msra.mxu0 0
    %999 = vmatprep.subr.bf16.mxu0 0
    %1000 = vmatpush1.bf16.msra.mxu0 0
    %1001 = vmatprep.subr.bf16.mxu0 0
    %1002 = vmatpush1.bf16.msra.mxu0 0
    %1003 = vmatprep.mubr.bf16.mxu0 0
    %1004 = vmatmul.mubr.bf16.gmra.mrb[0].mxu0 %v969
    %v1005 = vpop.f32.mrb[0].mxu0
    %v1006 = vadd.f32 0.0, %v1005
    %v1007 = vpop.f32.mrb[0].mxu0
    %v1008 = vpop.f32.mrb[0].mxu0
    %v1009 = vadd.f32 0.0, %v1008
    %v1010 = vpop.f32.mrb[0].mxu0
    %1011 = vdwg.mxu0
    %v1012 = vpack.c.bf16 %v962, %v959
    %v1013 = vpack.c.bf16 %v1009, %v1006
    %v1015 = vsel %vm168, %v1012, 0
    %v1018 = vsel %vm168, %v1013, 0
    %v1021 = vsel %vm659, %v161, 0
    %1023 = vmatprep.subr.bf16.mxu0 0
    %1024 = vmatpush1.bf16.msra.mxu0 %v1021
    %1025 = vmatprep.subr.bf16.mxu0 0
    %1026 = vmatpush1.bf16.msra.mxu0 0
    %1027 = vmatprep.subr.bf16.mxu0 0
    %1028 = vmatpush1.bf16.msra.mxu0 0
    %1029 = vmatprep.subr.bf16.mxu0 0
    %1030 = vmatpush1.bf16.msra.mxu0 0
    %1031 = vmatprep.subr.bf16.mxu0 0
    %1032 = vmatpush1.bf16.msra.mxu0 0
    %1033 = vmatprep.subr.bf16.mxu0 0
    %1034 = vmatpush1.bf16.msra.mxu0 0
    %1035 = vmatprep.subr.bf16.mxu0 0
    %1036 = vmatpush1.bf16.msra.mxu0 0
    %1037 = vmatprep.subr.bf16.mxu0 0
    %1038 = vmatpush1.bf16.msra.mxu0 0
    %1039 = vmatprep.subr.bf16.mxu0 0
    %1040 = vmatpush1.bf16.msra.mxu0 0
    %1041 = vmatprep.subr.bf16.mxu0 0
    %1042 = vmatpush1.bf16.msra.mxu0 0
    %1043 = vmatprep.subr.bf16.mxu0 0
    %1044 = vmatpush1.bf16.msra.mxu0 0
    %1045 = vmatprep.subr.bf16.mxu0 0
    %1046 = vmatpush1.bf16.msra.mxu0 0
    %1047 = vmatprep.subr.bf16.mxu0 0
    %1048 = vmatpush1.bf16.msra.mxu0 0
    %1049 = vmatprep.subr.bf16.mxu0 0
    %1050 = vmatpush1.bf16.msra.mxu0 0
    %1051 = vmatprep.subr.bf16.mxu0 0
    %1052 = vmatpush1.bf16.msra.mxu0 0
    %1053 = vmatprep.subr.bf16.mxu0 0
    %1054 = vmatpush1.bf16.msra.mxu0 0
    %1055 = vmatprep.mubr.bf16.mxu0 0
    %1056 = vmatmul.mubr.bf16.gmra.mrb[0].mxu0 %v1015
    %v1057 = vpop.f32.mrb[0].mxu0
    %v1058 = vadd.f32 0.0, %v1057
    %v1059 = vpop.f32.mrb[0].mxu0
    %v1060 = vpop.f32.mrb[0].mxu0
    %v1061 = vadd.f32 0.0, %v1060
    %v1062 = vpop.f32.mrb[0].mxu0
    %1063 = vmatprep.mubr.bf16.mxu0 0
    %1064 = vmatmul.mubr.bf16.gmra.mrb[0].mxu0 %v1018
    %v1065 = vpop.f32.mrb[0].mxu0
    %v1066 = vadd.f32 0.0, %v1065
    %v1067 = vpop.f32.mrb[0].mxu0
    %v1068 = vpop.f32.mrb[0].mxu0
    %v1069 = vadd.f32 0.0, %v1068
    %v1070 = vpop.f32.mrb[0].mxu0
    %1071 = vdwg.mxu0
    %v1072 = vadd.f32 %v756, %v1058
    %v1073 = vadd.f32 %v759, %v1061
    %v1074 = vadd.f32 %v764, %v1066
    %v1075 = vadd.f32 %v767, %v1069
    %1076 = vrot.lane.b32.xlu0 %v163, 104
    %v1077 = vpop.permute.xlu0 %1076
    %1078 = vrot.lane.b32.xlu0 %v163, 72
    %v1079 = vpop.permute.xlu0 %1078
    %v1081 = vsel %vm168, %v1077, 0
    %v1084 = vsel %vm168, %v1079, 0
    %1086 = vmatprep.subr.bf16.mxu0 0
    %1087 = vmatpush1.bf16.xpose.msra.mxu0 %v1084
    %1088 = vmatprep.subr.bf16.mxu0 0
    %1089 = vmatpush1.bf16.xpose.msra.mxu0 0
    %1090 = vmatprep.subr.bf16.mxu0 0
    %1091 = vmatpush1.bf16.xpose.msra.mxu0 0
    %1092 = vmatprep.subr.bf16.mxu0 0
    %1093 = vmatpush1.bf16.xpose.msra.mxu0 0
    %1094 = vmatprep.subr.bf16.mxu0 0
    %1095 = vmatpush1.bf16.xpose.msra.mxu0 0
    %1096 = vmatprep.subr.bf16.mxu0 0
    %1097 = vmatpush1.bf16.xpose.msra.mxu0 0
    %1098 = vmatprep.subr.bf16.mxu0 0
    %1099 = vmatpush1.bf16.xpose.msra.mxu0 0
    %1100 = vmatprep.subr.bf16.mxu0 0
    %1101 = vmatpush1.bf16.xpose.msra.mxu0 0
    %1102 = vmatprep.subr.bf16.mxu0 0
    %1103 = vmatpush1.bf16.xpose.msra.mxu0 0
    %1104 = vmatprep.subr.bf16.mxu0 0
    %1105 = vmatpush1.bf16.xpose.msra.mxu0 0
    %1106 = vmatprep.subr.bf16.mxu0 0
    %1107 = vmatpush1.bf16.xpose.msra.mxu0 0
    %1108 = vmatprep.subr.bf16.mxu0 0
    %1109 = vmatpush1.bf16.xpose.msra.mxu0 0
    %1110 = vmatprep.subr.bf16.mxu0 0
    %1111 = vmatpush1.bf16.xpose.msra.mxu0 0
    %1112 = vmatprep.subr.bf16.mxu0 0
    %1113 = vmatpush1.bf16.xpose.msra.mxu0 0
    %1114 = vmatprep.subr.bf16.mxu0 0
    %1115 = vmatpush1.bf16.xpose.msra.mxu0 0
    %1116 = vmatprep.subr.bf16.mxu0 0
    %1117 = vmatpush1.bf16.xpose.msra.mxu0 0
    %1118 = vmatprep.mubr.bf16.mxu0 0
    %1119 = vmatmul.mubr.bf16.gmra.mrb[0].mxu0 %v1081
    %v1120 = vpop.f32.mrb[0].mxu0
    %v1121 = vadd.f32 0.0, %v1120
    %v1122 = vpop.f32.mrb[0].mxu0
    %v1123 = vpop.f32.mrb[0].mxu0
    %v1124 = vadd.f32 0.0, %v1123
    %v1125 = vpop.f32.mrb[0].mxu0
    %1126 = vdwg.mxu0
    %1127 = vrot.lane.b32.xlu0 %v164, 104
    %v1128 = vpop.permute.xlu0 %1127
    %1129 = vrot.lane.b32.xlu0 %v164, 72
    %v1130 = vpop.permute.xlu0 %1129
    %v1132 = vsel %vm168, %v1128, 0
    %v1135 = vsel %vm168, %v1130, 0
    %1137 = vmatprep.subr.bf16.mxu0 0
    %1138 = vmatpush1.bf16.xpose.msra.mxu0 %v1135
    %1139 = vmatprep.subr.bf16.mxu0 0
    %1140 = vmatpush1.bf16.xpose.msra.mxu0 0
    %1141 = vmatprep.subr.bf16.mxu0 0
    %1142 = vmatpush1.bf16.xpose.msra.mxu0 0
    %1143 = vmatprep.subr.bf16.mxu0 0
    %1144 = vmatpush1.bf16.xpose.msra.mxu0 0
    %1145 = vmatprep.subr.bf16.mxu0 0
    %1146 = vmatpush1.bf16.xpose.msra.mxu0 0
    %1147 = vmatprep.subr.bf16.mxu0 0
    %1148 = vmatpush1.bf16.xpose.msra.mxu0 0
    %1149 = vmatprep.subr.bf16.mxu0 0
    %1150 = vmatpush1.bf16.xpose.msra.mxu0 0
    %1151 = vmatprep.subr.bf16.mxu0 0
    %1152 = vmatpush1.bf16.xpose.msra.mxu0 0
    %1153 = vmatprep.subr.bf16.mxu0 0
    %1154 = vmatpush1.bf16.xpose.msra.mxu0 0
    %1155 = vmatprep.subr.bf16.mxu0 0
    %1156 = vmatpush1.bf16.xpose.msra.mxu0 0
    %1157 = vmatprep.subr.bf16.mxu0 0
    %1158 = vmatpush1.bf16.xpose.msra.mxu0 0
    %1159 = vmatprep.subr.bf16.mxu0 0
    %1160 = vmatpush1.bf16.xpose.msra.mxu0 0
    %1161 = vmatprep.subr.bf16.mxu0 0
    %1162 = vmatpush1.bf16.xpose.msra.mxu0 0
    %1163 = vmatprep.subr.bf16.mxu0 0
    %1164 = vmatpush1.bf16.xpose.msra.mxu0 0
    %1165 = vmatprep.subr.bf16.mxu0 0
    %1166 = vmatpush1.bf16.xpose.msra.mxu0 0
    %1167 = vmatprep.subr.bf16.mxu0 0
    %1168 = vmatpush1.bf16.xpose.msra.mxu0 0
    %1169 = vmatprep.mubr.bf16.mxu0 0
    %1170 = vmatmul.mubr.bf16.gmra.mrb[0].mxu0 %v1132
    %v1171 = vpop.f32.mrb[0].mxu0
    %v1172 = vadd.f32 0.0, %v1171
    %v1173 = vpop.f32.mrb[0].mxu0
    %v1174 = vpop.f32.mrb[0].mxu0
    %v1175 = vadd.f32 0.0, %v1174
    %v1176 = vpop.f32.mrb[0].mxu0
    %1177 = vdwg.mxu0
    %v1178 = vsel %vm266, %v1121, -inf
    %1179 = vmax.xlane.f32.xlu0 %v1178
    %v1180 = vpop.xlane.xlu0 %1179
    %v1181 = vsel %vm266, %v1124, -inf
    %1182 = vmax.xlane.f32.xlu0 %v1181
    %v1183 = vpop.xlane.xlu0 %1182
    %v1184 = vsel %vm266, %v1172, -inf
    %1185 = vmax.xlane.f32.xlu0 %v1184
    %v1186 = vpop.xlane.xlu0 %1185
    %v1187 = vsel %vm266, %v1175, -inf
    %1188 = vmax.xlane.f32.xlu0 %v1187
    %v1189 = vpop.xlane.xlu0 %1188
    %v1190 = vsub.f32 %v1121, %v1180
    %v1191 = vsub.f32 %v1124, %v1183
    %v1192 = vsub.f32 %v1172, %v1186
    %v1193 = vsub.f32 %v1175, %v1189
    %v1194 = vmul.f32 %v1190, 1.442695
    %v1195 = vpow.pop %v1194
    %v1196 = vmul.f32 %v1191, 1.442695
    %v1197 = vpow.pop %v1196
    %v1198 = vmul.f32 %v1192, 1.442695
    %v1199 = vpow.pop %v1198
    %v1200 = vmul.f32 %v1193, 1.442695
    %v1201 = vpow.pop %v1200
    %v1202 = vsel %vm266, %v1195, 0.0
    %1203 = vadd.xlane.f32.xlu0 %v1202
    %v1204 = vpop.xlane.xlu0 %1203
    %v1205 = vsel %vm266, %v1197, 0.0
    %1206 = vadd.xlane.f32.xlu0 %v1205
    %v1207 = vpop.xlane.xlu0 %1206
    %v1208 = vsel %vm266, %v1199, 0.0
    %1209 = vadd.xlane.f32.xlu0 %v1208
    %v1210 = vpop.xlane.xlu0 %1209
    %v1211 = vsel %vm266, %v1201, 0.0
    %1212 = vadd.xlane.f32.xlu0 %v1211
    %v1213 = vpop.xlane.xlu0 %1212
    %v1214 = vrcp.pop %v1204
    %v1215 = vrcp.pop %v1207
    %v1216 = vrcp.pop %v1210
    %v1217 = vrcp.pop %v1213
    %v1218 = vmul.f32 %v1195, %v1214
    %v1219 = vmul.f32 %v1197, %v1215
    %v1220 = vmul.f32 %v1199, %v1216
    %v1221 = vmul.f32 %v1201, %v1217
    %v1222 = vpack.c.bf16 %v1219, %v1218
    %v1223 = vpack.c.bf16 %v1221, %v1220
    %1224 = vrot.lane.b32.xlu0 %v163, 40
    %v1225 = vpop.permute.xlu0 %1224
    %v1228 = vsel %vm266, %v1222, 0
    %1230 = vmatprep.subr.bf16.mxu0 0
    %1231 = vmatpush1.bf16.msra.mxu0 %v1225
    %1232 = vmatprep.subr.bf16.mxu0 0
    %1233 = vmatpush1.bf16.msra.mxu0 0
    %1234 = vmatprep.subr.bf16.mxu0 0
    %1235 = vmatpush1.bf16.msra.mxu0 0
    %1236 = vmatprep.subr.bf16.mxu0 0
    %1237 = vmatpush1.bf16.msra.mxu0 0
    %1238 = vmatprep.subr.bf16.mxu0 0
    %1239 = vmatpush1.bf16.msra.mxu0 0
    %1240 = vmatprep.subr.bf16.mxu0 0
    %1241 = vmatpush1.bf16.msra.mxu0 0
    %1242 = vmatprep.subr.bf16.mxu0 0
    %1243 = vmatpush1.bf16.msra.mxu0 0
    %1244 = vmatprep.subr.bf16.mxu0 0
    %1245 = vmatpush1.bf16.msra.mxu0 0
    %1246 = vmatprep.subr.bf16.mxu0 0
    %1247 = vmatpush1.bf16.msra.mxu0 0
    %1248 = vmatprep.subr.bf16.mxu0 0
    %1249 = vmatpush1.bf16.msra.mxu0 0
    %1250 = vmatprep.subr.bf16.mxu0 0
    %1251 = vmatpush1.bf16.msra.mxu0 0
    %1252 = vmatprep.subr.bf16.mxu0 0
    %1253 = vmatpush1.bf16.msra.mxu0 0
    %1254 = vmatprep.subr.bf16.mxu0 0
    %1255 = vmatpush1.bf16.msra.mxu0 0
    %1256 = vmatprep.subr.bf16.mxu0 0
    %1257 = vmatpush1.bf16.msra.mxu0 0
    %1258 = vmatprep.subr.bf16.mxu0 0
    %1259 = vmatpush1.bf16.msra.mxu0 0
    %1260 = vmatprep.subr.bf16.mxu0 0
    %1261 = vmatpush1.bf16.msra.mxu0 0
    %1262 = vmatprep.mubr.bf16.mxu0 0
    %1263 = vmatmul.mubr.bf16.gmra.mrb[0].mxu0 %v1228
    %v1264 = vpop.f32.mrb[0].mxu0
    %v1265 = vadd.f32 0.0, %v1264
    %v1266 = vpop.f32.mrb[0].mxu0
    %v1267 = vpop.f32.mrb[0].mxu0
    %v1268 = vadd.f32 0.0, %v1267
    %v1269 = vpop.f32.mrb[0].mxu0
    %1270 = vdwg.mxu0
    %1271 = vrot.lane.b32.xlu0 %v164, 40
    %v1272 = vpop.permute.xlu0 %1271
    %v1275 = vsel %vm266, %v1223, 0
    %1277 = vmatprep.subr.bf16.mxu0 0
    %1278 = vmatpush1.bf16.msra.mxu0 %v1272
    %1279 = vmatprep.subr.bf16.mxu0 0
    %1280 = vmatpush1.bf16.msra.mxu0 0
    %1281 = vmatprep.subr.bf16.mxu0 0
    %1282 = vmatpush1.bf16.msra.mxu0 0
    %1283 = vmatprep.subr.bf16.mxu0 0
    %1284 = vmatpush1.bf16.msra.mxu0 0
    %1285 = vmatprep.subr.bf16.mxu0 0
    %1286 = vmatpush1.bf16.msra.mxu0 0
    %1287 = vmatprep.subr.bf16.mxu0 0
    %1288 = vmatpush1.bf16.msra.mxu0 0
    %1289 = vmatprep.subr.bf16.mxu0 0
    %1290 = vmatpush1.bf16.msra.mxu0 0
    %1291 = vmatprep.subr.bf16.mxu0 0
    %1292 = vmatpush1.bf16.msra.mxu0 0
    %1293 = vmatprep.subr.bf16.mxu0 0
    %1294 = vmatpush1.bf16.msra.mxu0 0
    %1295 = vmatprep.subr.bf16.mxu0 0
    %1296 = vmatpush1.bf16.msra.mxu0 0
    %1297 = vmatprep.subr.bf16.mxu0 0
    %1298 = vmatpush1.bf16.msra.mxu0 0
    %1299 = vmatprep.subr.bf16.mxu0 0
    %1300 = vmatpush1.bf16.msra.mxu0 0
    %1301 = vmatprep.subr.bf16.mxu0 0
    %1302 = vmatpush1.bf16.msra.mxu0 0
    %1303 = vmatprep.subr.bf16.mxu0 0
    %1304 = vmatpush1.bf16.msra.mxu0 0
    %1305 = vmatprep.subr.bf16.mxu0 0
    %1306 = vmatpush1.bf16.msra.mxu0 0
    %1307 = vmatprep.subr.bf16.mxu0 0
    %1308 = vmatpush1.bf16.msra.mxu0 0
    %1309 = vmatprep.mubr.bf16.mxu0 0
    %1310 = vmatmul.mubr.bf16.gmra.mrb[0].mxu0 %v1275
    %v1311 = vpop.f32.mrb[0].mxu0
    %v1312 = vadd.f32 0.0, %v1311
    %v1313 = vpop.f32.mrb[0].mxu0
    %v1314 = vpop.f32.mrb[0].mxu0
    %v1315 = vadd.f32 0.0, %v1314
    %v1316 = vpop.f32.mrb[0].mxu0
    %1317 = vdwg.mxu0
    %v1318 = vpack.c.bf16 %v1268, %v1265
    %v1319 = vpack.c.bf16 %v1315, %v1312
    %v1321 = vsel %vm168, %v1318, 0
    %v1324 = vsel %vm168, %v1319, 0
    %v1327 = vsel %vm659, %v162, 0
    %1329 = vmatprep.subr.bf16.mxu0 0
    %1330 = vmatpush1.bf16.msra.mxu0 %v1327
    %1331 = vmatprep.subr.bf16.mxu0 0
    %1332 = vmatpush1.bf16.msra.mxu0 0
    %1333 = vmatprep.subr.bf16.mxu0 0
    %1334 = vmatpush1.bf16.msra.mxu0 0
    %1335 = vmatprep.subr.bf16.mxu0 0
    %1336 = vmatpush1.bf16.msra.mxu0 0
    %1337 = vmatprep.subr.bf16.mxu0 0
    %1338 = vmatpush1.bf16.msra.mxu0 0
    %1339 = vmatprep.subr.bf16.mxu0 0
    %1340 = vmatpush1.bf16.msra.mxu0 0
    %1341 = vmatprep.subr.bf16.mxu0 0
    %1342 = vmatpush1.bf16.msra.mxu0 0
    %1343 = vmatprep.subr.bf16.mxu0 0
    %1344 = vmatpush1.bf16.msra.mxu0 0
    %1345 = vmatprep.subr.bf16.mxu0 0
    %1346 = vmatpush1.bf16.msra.mxu0 0
    %1347 = vmatprep.subr.bf16.mxu0 0
    %1348 = vmatpush1.bf16.msra.mxu0 0
    %1349 = vmatprep.subr.bf16.mxu0 0
    %1350 = vmatpush1.bf16.msra.mxu0 0
    %1351 = vmatprep.subr.bf16.mxu0 0
    %1352 = vmatpush1.bf16.msra.mxu0 0
    %1353 = vmatprep.subr.bf16.mxu0 0
    %1354 = vmatpush1.bf16.msra.mxu0 0
    %1355 = vmatprep.subr.bf16.mxu0 0
    %1356 = vmatpush1.bf16.msra.mxu0 0
    %1357 = vmatprep.subr.bf16.mxu0 0
    %1358 = vmatpush1.bf16.msra.mxu0 0
    %1359 = vmatprep.subr.bf16.mxu0 0
    %1360 = vmatpush1.bf16.msra.mxu0 0
    %1361 = vmatprep.mubr.bf16.mxu0 0
    %1362 = vmatmul.mubr.bf16.gmra.mrb[0].mxu0 %v1321
    %v1363 = vpop.f32.mrb[0].mxu0
    %v1364 = vadd.f32 0.0, %v1363
    %v1365 = vpop.f32.mrb[0].mxu0
    %v1366 = vpop.f32.mrb[0].mxu0
    %v1367 = vadd.f32 0.0, %v1366
    %v1368 = vpop.f32.mrb[0].mxu0
    %1369 = vmatprep.mubr.bf16.mxu0 0
    %1370 = vmatmul.mubr.bf16.gmra.mrb[0].mxu0 %v1324
    %v1371 = vpop.f32.mrb[0].mxu0
    %v1372 = vadd.f32 0.0, %v1371
    %v1373 = vpop.f32.mrb[0].mxu0
    %v1374 = vpop.f32.mrb[0].mxu0
    %v1375 = vadd.f32 0.0, %v1374
    %v1376 = vpop.f32.mrb[0].mxu0
    %1377 = vdwg.mxu0
    %v1378 = vadd.f32 %v1072, %v1364
    %v1379 = vadd.f32 %v1073, %v1367
    %v1380 = vadd.f32 %v1074, %v1372
    %v1381 = vadd.f32 %v1075, %v1375
    %v1382 = vld [vmem:[%s4] sm:$0x1]
    %v1384 = vlaneseq
    %v1385 = vshrl.u32 %v1384, 7
    %v1386 = vsub.s32 0, %v1385
    %v1387 = vrot.slane %v1382, %v1386
    %v1389 = vadd.f32 %v1378, %v1387
    %v1390 = vadd.f32 %v1379, %v1387
    %v1391 = vadd.f32 %v1380, %v1387
    %v1392 = vadd.f32 %v1381, %v1387
    %v1393 = vadd.f32 %v74, %v1389
    %v1394 = vadd.f32 %v75, %v1390
    %v1395 = vadd.f32 %v76, %v1391
    %v1396 = vadd.f32 %v77, %v1392
    %v1397 = vsel %vm103, %v1393, 0.0
    %v1398 = vsel %vm103, %v1394, 0.0
    %v1399 = vadd.f32 %v1397, %v1398
    %v1400 = vsel %vm103, %v1395, 0.0
    %v1401 = vadd.f32 %v1399, %v1400
    %v1402 = vsel %vm103, %v1396, 0.0
    %v1403 = vadd.f32 %v1401, %v1402
    %v1404 = vrot.slane %v1403, 4
    %v1405 = vadd.f32 %v1403, %v1404
    %v1406 = vrot.slane %v1405, 2
    %v1407 = vadd.f32 %v1405, %v1406
    %v1408 = vrot.slane %v1407, 1
    %v1409 = vadd.f32 %v1407, %v1408
    %v1410 = vrcp.pop 32.0
    %v1411 = vmul.f32 %v1409, %v1410
    %v1412 = vsub.f32 %v1393, %v1411
    %v1413 = vsub.f32 %v1394, %v1411
    %v1414 = vsub.f32 %v1395, %v1411
    %v1415 = vsub.f32 %v1396, %v1411
    %v1416 = vmul.f32 %v1412, %v1412
    %v1417 = vmul.f32 %v1413, %v1413
    %v1418 = vmul.f32 %v1414, %v1414
    %v1419 = vmul.f32 %v1415, %v1415
    %v1420 = vsel %vm103, %v1416, 0.0
    %v1421 = vsel %vm103, %v1417, 0.0
    %v1422 = vadd.f32 %v1420, %v1421
    %v1423 = vsel %vm103, %v1418, 0.0
    %v1424 = vadd.f32 %v1422, %v1423
    %v1425 = vsel %vm103, %v1419, 0.0
    %v1426 = vadd.f32 %v1424, %v1425
    %v1427 = vrot.slane %v1426, 4
    %v1428 = vadd.f32 %v1426, %v1427
    %v1429 = vrot.slane %v1428, 2
    %v1430 = vadd.f32 %v1428, %v1429
    %v1431 = vrot.slane %v1430, 1
    %v1432 = vadd.f32 %v1430, %v1431
    %v1433 = vmul.f32 %v1432, %v1410
    %v1434 = vld [vmem:[%s5] sm:$0x1]
    %v1435 = vadd.f32 %v1433, 1e-05
    %v1436 = vrsqrt.pop %v1435
    %v1437 = vmul.f32 %v1434, %v1436
    %v1439 = vlaneseq
    %v1440 = vshrl.u32 %v1439, 7
    %v1441 = vsub.s32 0, %v1440
    %v1442 = vrot.slane %v1437, %v1441
    %v1444 = vmul.f32 %v1412, %v1442
    %v1445 = vmul.f32 %v1413, %v1442
    %v1446 = vmul.f32 %v1414, %v1442
    %v1447 = vmul.f32 %v1415, %v1442
    %v1448 = vld [vmem:[%s6] sm:$0x1]
    %v1450 = vlaneseq
    %v1451 = vshrl.u32 %v1450, 7
    %v1452 = vsub.s32 0, %v1451
    %v1453 = vrot.slane %v1448, %v1452
    %v1455 = vadd.f32 %v1444, %v1453
    %v1456 = vadd.f32 %v1445, %v1453
    %v1457 = vadd.f32 %v1446, %v1453
    %v1458 = vadd.f32 %v1447, %v1453
    %v1459 = vpack.c.bf16 %v1456, %v1455
    %v1460 = vpack.c.bf16 %v1458, %v1457
    %v1461 = vld [vmem:[#allocation5] sm:$0xf]
    %v1462 = vld [vmem:[#allocation5 + $0x4] sm:$0xf]
    %v1463 = vld [vmem:[#allocation5 + $0x8] sm:$0xf]
    %v1464 = vld [vmem:[#allocation5 + $0xc] sm:$0xf]
    %v1465 = vld [vmem:[%s8] sm:$0x1]
    %v1467 = vlaneseq
    %v1468 = vshrl.u32 %v1467, 7
    %v1469 = vsub.s32 0, %v1468
    %v1470 = vrot.slane %v1465, %v1469
    %v1476 = vunpack.c.l.b16 %v1461
    %v1477 = vunpack.c.l.b16 %v1462
    %v1478 = vunpack.c.l.b16 %v1463
    %v1479 = vunpack.c.l.b16 %v1464
    %v1480 = vpack.c.b16 %v1477, %v1476
    %v1481 = vpack.c.b16 %v1479, %v1478
    %v1485 = vsel %vm103, %v1459, 0
    %v1488 = vsel %vm103, %v1460, 0
    %1490 = vmatprep.subr.bf16.mxu0 0
    %1491 = vmatpush1.bf16.msra.mxu0 %v1480
    %1492 = vmatprep.subr.bf16.mxu0 0
    %1493 = vmatpush1.bf16.msra.mxu0 %v1481
    %1494 = vmatprep.subr.bf16.mxu0 0
    %1495 = vmatpush1.bf16.msra.mxu0 0
    %1496 = vmatprep.subr.bf16.mxu0 0
    %1497 = vmatpush1.bf16.msra.mxu0 0
    %1498 = vmatprep.subr.bf16.mxu0 0
    %1499 = vmatpush1.bf16.msra.mxu0 0
    %1500 = vmatprep.subr.bf16.mxu0 0
    %1501 = vmatpush1.bf16.msra.mxu0 0
    %1502 = vmatprep.subr.bf16.mxu0 0
    %1503 = vmatpush1.bf16.msra.mxu0 0
    %1504 = vmatprep.subr.bf16.mxu0 0
    %1505 = vmatpush1.bf16.msra.mxu0 0
    %1506 = vmatprep.subr.bf16.mxu0 0
    %1507 = vmatpush1.bf16.msra.mxu0 0
    %1508 = vmatprep.subr.bf16.mxu0 0
    %1509 = vmatpush1.bf16.msra.mxu0 0
    %1510 = vmatprep.subr.bf16.mxu0 0
    %1511 = vmatpush1.bf16.msra.mxu0 0
    %1512 = vmatprep.subr.bf16.mxu0 0
    %1513 = vmatpush1.bf16.msra.mxu0 0
    %1514 = vmatprep.subr.bf16.mxu0 0
    %1515 = vmatpush1.bf16.msra.mxu0 0
    %1516 = vmatprep.subr.bf16.mxu0 0
    %1517 = vmatpush1.bf16.msra.mxu0 0
    %1518 = vmatprep.subr.bf16.mxu0 0
    %1519 = vmatpush1.bf16.msra.mxu0 0
    %1520 = vmatprep.subr.bf16.mxu0 0
    %1521 = vmatpush1.bf16.msra.mxu0 0
    %1522 = vmatprep.mubr.bf16.mxu0 0
    %1523 = vmatmul.mubr.bf16.gmra.mrb[0].mxu0 %v1485
    %v1524 = vpop.f32.mrb[0].mxu0
    %v1525 = vadd.f32 %v1470, %v1524
    %v1526 = vpop.f32.mrb[0].mxu0
    %v1527 = vpop.f32.mrb[0].mxu0
    %v1528 = vadd.f32 %v1470, %v1527
    %v1529 = vpop.f32.mrb[0].mxu0
    %1530 = vmatprep.mubr.bf16.mxu0 0
    %1531 = vmatmul.mubr.bf16.gmra.mrb[0].mxu0 %v1488
    %v1532 = vpop.f32.mrb[0].mxu0
    %v1533 = vadd.f32 %v1470, %v1532
    %v1534 = vpop.f32.mrb[0].mxu0
    %v1535 = vpop.f32.mrb[0].mxu0
    %v1536 = vadd.f32 %v1470, %v1535
    %v1537 = vpop.f32.mrb[0].mxu0
    %1538 = vdwg.mxu0
    %v1539 = vmul.f32 %v1525, 0.5
    %v1540 = vmul.f32 %v1528, 0.5
    %v1541 = vmul.f32 %v1533, 0.5
    %v1542 = vmul.f32 %v1536, 0.5
    %v1543 = vmul.f32 %v1525, 0.70710677
    %v1544 = vmul.f32 %v1528, 0.70710677
    %v1545 = vmul.f32 %v1533, 0.70710677
    %v1546 = vmul.f32 %v1536, 0.70710677
    %v1547 = verf.f32.pop %v1543
    %v1548 = verf.f32.pop %v1544
    %v1549 = verf.f32.pop %v1545
    %v1550 = verf.f32.pop %v1546
    %v1551 = vadd.f32 %v1547, 1.0
    %v1552 = vadd.f32 %v1548, 1.0
    %v1553 = vadd.f32 %v1549, 1.0
    %v1554 = vadd.f32 %v1550, 1.0
    %v1555 = vmul.f32 %v1539, %v1551
    %v1556 = vmul.f32 %v1540, %v1552
    %v1557 = vmul.f32 %v1541, %v1553
    %v1558 = vmul.f32 %v1542, %v1554
    %v1559 = vpack.c.bf16 %v1556, %v1555
    %v1560 = vpack.c.bf16 %v1558, %v1557
    %v1561 = vld [vmem:[%s9] sm:$0xf]
    %v1562 = vld [vmem:[%s9 + $0x4] sm:$0xf]
    %v1563 = vld [vmem:[%s9 + $0x8] sm:$0xf]
    %v1564 = vld [vmem:[%s9 + $0xc] sm:$0xf]
    %v1565 = vld [vmem:[%s9 + $0x10] sm:$0xf]
    %v1566 = vld [vmem:[%s9 + $0x14] sm:$0xf]
    %v1567 = vld [vmem:[%s9 + $0x18] sm:$0xf]
    %v1568 = vld [vmem:[%s9 + $0x1c] sm:$0xf]
    %v1569 = vld [vmem:[%s10] sm:$0x1]
    %v1571 = vlaneseq
    %v1572 = vshrl.u32 %v1571, 7
    %v1573 = vsub.s32 0, %v1572
    %v1574 = vrot.slane %v1569, %v1573
    %v1584 = vunpack.c.l.b16 %v1561
    %v1585 = vunpack.c.l.b16 %v1562
    %v1586 = vunpack.c.l.b16 %v1563
    %v1587 = vunpack.c.l.b16 %v1564
    %v1588 = vunpack.c.l.b16 %v1565
    %v1589 = vunpack.c.l.b16 %v1566
    %v1590 = vunpack.c.l.b16 %v1567
    %v1591 = vunpack.c.l.b16 %v1568
    %v1592 = vpack.c.b16 %v1585, %v1584
    %v1593 = vpack.c.b16 %v1587, %v1586
    %v1594 = vpack.c.b16 %v1589, %v1588
    %v1595 = vpack.c.b16 %v1591, %v1590
    %vm1600 = vcmask 523264
    %v1602 = vsel %vm1600, %v1559, 0
    %v1605 = vsel %vm1600, %v1560, 0
    %1607 = vmatprep.subr.bf16.mxu0 0
    %1608 = vmatpush1.bf16.msra.mxu0 %v1592
    %1609 = vmatprep.subr.bf16.mxu0 0
    %1610 = vmatpush1.bf16.msra.mxu0 %v1593
    %1611 = vmatprep.subr.bf16.mxu0 0
    %1612 = vmatpush1.bf16.msra.mxu0 %v1594
    %1613 = vmatprep.subr.bf16.mxu0 0
    %1614 = vmatpush1.bf16.msra.mxu0 %v1595
    %1615 = vmatprep.subr.bf16.mxu0 0
    %1616 = vmatpush1.bf16.msra.mxu0 0
    %1617 = vmatprep.subr.bf16.mxu0 0
    %1618 = vmatpush1.bf16.msra.mxu0 0
    %1619 = vmatprep.subr.bf16.mxu0 0
    %1620 = vmatpush1.bf16.msra.mxu0 0
    %1621 = vmatprep.subr.bf16.mxu0 0
    %1622 = vmatpush1.bf16.msra.mxu0 0
    %1623 = vmatprep.subr.bf16.mxu0 0
    %1624 = vmatpush1.bf16.msra.mxu0 0
    %1625 = vmatprep.subr.bf16.mxu0 0
    %1626 = vmatpush1.bf16.msra.mxu0 0
    %1627 = vmatprep.subr.bf16.mxu0 0
    %1628 = vmatpush1.bf16.msra.mxu0 0
    %1629 = vmatprep.subr.bf16.mxu0 0
    %1630 = vmatpush1.bf16.msra.mxu0 0
    %1631 = vmatprep.subr.bf16.mxu0 0
    %1632 = vmatpush1.bf16.msra.mxu0 0
    %1633 = vmatprep.subr.bf16.mxu0 0
    %1634 = vmatpush1.bf16.msra.mxu0 0
    %1635 = vmatprep.subr.bf16.mxu0 0
    %1636 = vmatpush1.bf16.msra.mxu0 0
    %1637 = vmatprep.subr.bf16.mxu0 0
    %1638 = vmatpush1.bf16.msra.mxu0 0
    %1639 = vmatprep.mubr.bf16.mxu0 0
    %1640 = vmatmul.mubr.bf16.gmra.mrb[0].mxu0 %v1602
    %v1641 = vpop.f32.mrb[0].mxu0
    %v1642 = vadd.f32 %v1574, %v1641
    %v1643 = vpop.f32.mrb[0].mxu0
    %v1644 = vpop.f32.mrb[0].mxu0
    %v1645 = vadd.f32 %v1574, %v1644
    %v1646 = vpop.f32.mrb[0].mxu0
    %1647 = vmatprep.mubr.bf16.mxu0 0
    %1648 = vmatmul.mubr.bf16.gmra.mrb[0].mxu0 %v1605
    %v1649 = vpop.f32.mrb[0].mxu0
    %v1650 = vadd.f32 %v1574, %v1649
    %v1651 = vpop.f32.mrb[0].mxu0
    %v1652 = vpop.f32.mrb[0].mxu0
    %v1653 = vadd.f32 %v1574, %v1652
    %v1654 = vpop.f32.mrb[0].mxu0
    %1655 = vdwg.mxu0
    %v1656 = vadd.f32 %v1455, %v1642
    %v1657 = vadd.f32 %v1456, %v1645
    %v1658 = vadd.f32 %v1457, %v1650
    %v1659 = vadd.f32 %v1458, %v1653
    %v1660 = vsel %vm103, %v1656, 0.0
    %v1661 = vsel %vm103, %v1657, 0.0
    %v1662 = vadd.f32 %v1660, %v1661
    %v1663 = vsel %vm103, %v1658, 0.0
    %v1664 = vadd.f32 %v1662, %v1663
    %v1665 = vsel %vm103, %v1659, 0.0
    %v1666 = vadd.f32 %v1664, %v1665
    %v1667 = vrot.slane %v1666, 4
    %v1668 = vadd.f32 %v1666, %v1667
    %v1669 = vrot.slane %v1668, 2
    %v1670 = vadd.f32 %v1668, %v1669
    %v1671 = vrot.slane %v1670, 1
    %v1672 = vadd.f32 %v1670, %v1671
    %v1673 = vmul.f32 %v1672, %v1410
    %v1674 = vsub.f32 %v1656, %v1673
    %v1675 = vsub.f32 %v1657, %v1673
    %v1676 = vsub.f32 %v1658, %v1673
    %v1677 = vsub.f32 %v1659, %v1673
    %v1678 = vmul.f32 %v1674, %v1674
    %v1679 = vmul.f32 %v1675, %v1675
    %v1680 = vmul.f32 %v1676, %v1676
    %v1681 = vmul.f32 %v1677, %v1677
    %v1682 = vsel %vm103, %v1678, 0.0
    %v1683 = vsel %vm103, %v1679, 0.0
    %v1684 = vadd.f32 %v1682, %v1683
    %v1685 = vsel %vm103, %v1680, 0.0
    %v1686 = vadd.f32 %v1684, %v1685
    %v1687 = vsel %vm103, %v1681, 0.0
    %v1688 = vadd.f32 %v1686, %v1687
    %v1689 = vrot.slane %v1688, 4
    %v1690 = vadd.f32 %v1688, %v1689
    %v1691 = vrot.slane %v1690, 2
    %v1692 = vadd.f32 %v1690, %v1691
    %v1693 = vrot.slane %v1692, 1
    %v1694 = vadd.f32 %v1692, %v1693
    %v1695 = vmul.f32 %v1694, %v1410
    %v1696 = vld [vmem:[%s11] sm:$0x1]
    %v1697 = vadd.f32 %v1695, 1e-05
    %v1698 = vrsqrt.pop %v1697
    %v1699 = vmul.f32 %v1696, %v1698
    %v1701 = vlaneseq
    %v1702 = vshrl.u32 %v1701, 7
    %v1703 = vsub.s32 0, %v1702
    %v1704 = vrot.slane %v1699, %v1703
    %v1706 = vmul.f32 %v1674, %v1704
    %v1707 = vmul.f32 %v1675, %v1704
    %v1708 = vmul.f32 %v1676, %v1704
    %v1709 = vmul.f32 %v1677, %v1704
    %v1710 = vld [vmem:[%s12] sm:$0x1]
    %v1712 = vlaneseq
    %v1713 = vshrl.u32 %v1712, 7
    %v1714 = vsub.s32 0, %v1713
    %v1715 = vrot.slane %v1710, %v1714
    %v1717 = vadd.f32 %v1706, %v1715
    %v1718 = vadd.f32 %v1707, %v1715
    %v1719 = vadd.f32 %v1708, %v1715
    %v1720 = vadd.f32 %v1709, %v1715
    %1721 = vst.msk [vmem:[#allocation7] sm:$0xff] %vm103, %v1717
    %1722 = vst.msk [vmem:[#allocation7 + $0x8] sm:$0xff] %vm103, %v1718
    %1723 = vst.msk [vmem:[#allocation7 + $0x10] sm:$0xff] %vm103, %v1719
    %1724 = vst.msk [vmem:[#allocation7 + $0x18] sm:$0xff] %vm103, %v1720
    // Predicated region
    $region62: #{tpu_custom_call.1} parent=1 // pred_check
      _
    $region63: #{tpu_custom_call.1} parent=1 // pred_check_branch
      %1726 = sbr.rel (0) target = $region65
    $region64: #{tpu_custom_call.1} parent=1 // pred_region
      %s1728 = ssub.s32 512, 512
      %1729 = vsyncadd [#allocation4], %s1728
      %s1730 = sshll.u32 [#allocation7], 4
      %s1731 = int_to_ptr.vmem [resolvable:$true] %s1730
      %1736 = dma.vmem_to_hbm [thread:$0]  %s1731, 512, %s13, [#allocation4], 128, 128, 8
    $region65: #{tpu_custom_call.1} parent=1 // pred_fallthru
      _
    // Predicated region
    $region66: #{tpu_custom_call.1} parent=1 // pred_check
      _
    $region67: #{tpu_custom_call.1} parent=1 // pred_check_branch
      %1738 = sbr.rel (0) target = $region69
    $region68: #{tpu_custom_call.1} parent=1 // pred_region
      %1739 = dma.done [#allocation4], 512
    $region69: #{tpu_custom_call.1} parent=1 // pred_fallthru
      _
    %1740 = vsyncpa [#allocation3], 1
    %1741 = vsyncpa [#allocation6], 1
    %1742 = vsyncpa [#allocation4], 1

</llo_original>
